<compile_context>
chip_gen: v7x
topology: tpu7x:2x2x1
jax: 0.10.0
libtpu: 0.0.40
codegen_flags: <defaults>
</compile_context>

<pallas_src>
import jax
import jax.numpy as jnp
from jax import lax
from jax.experimental import pallas as pl
from jax.experimental.pallas import tpu as pltpu


# ----------------------------------------------------------------------------
# Pallas kernel: one grid step = one time chunk of Tc steps for BOTH
# directions (forward chunk i, backward chunk n_chunks-1-i).
#   len_ref:   (Bp, 1)       int32  sequence lengths (0 for padded rows)
#   xf_ref:    (Tc*Bp, E)    bf16   forward-direction x chunk (time-major)
#   xb_ref:    (Tc*Bp, E)    bf16   backward-direction x chunk
#   wih*_ref:  (E, 4H)       bf16   input weights, gate order [i, f, o, g]
#   whh*_ref:  (H, 4H)       bf16   recurrent weights, gate order [i, f, o, g]
#   b*_ref:    (1, 4H)       f32    b_ih + b_hh per direction
#   out_ref:   (2, Bp, H)    f32    row 0 = forward final h, row 1 = backward
#   h*/c*_ref: (Bp, H)       f32    persistent carry scratch (across grid)
#   gx*_ref:   (Tc*Bp, 4H)   f32    per-chunk hoisted input-gate scratch
# ----------------------------------------------------------------------------
def birnn_lstm_kernel(len_ref, xf_ref, xb_ref,
                      wihf_ref, wihb_ref, whhf_ref, whhb_ref,
                      bf_ref, bb_ref,
                      out_ref,
                      hf_ref, cf_ref, hb_ref, cb_ref,
                      gxf_ref, gxb_ref):
    Bp = len_ref.shape[0]
    Tc = xf_ref.shape[0] // Bp
    H = whhf_ref.shape[0]
    H3 = 3 * H

    chunk = pl.program_id(0)
    n_chunks = pl.num_programs(0)
    t_total = n_chunks * Tc

    # Reset the persistent h/c carry at the first time chunk.
    @pl.when(chunk == 0)
    def _():
        hf_ref[...] = jnp.zeros_like(hf_ref)
        cf_ref[...] = jnp.zeros_like(cf_ref)
        hb_ref[...] = jnp.zeros_like(hb_ref)
        cb_ref[...] = jnp.zeros_like(cb_ref)

    # Hoisted per-chunk input projection: one matmul per direction.
    gxf_ref[...] = (jnp.dot(xf_ref[...], wihf_ref[...],
                            preferred_element_type=jnp.float32) + bf_ref[...])
    gxb_ref[...] = (jnp.dot(xb_ref[...], wihb_ref[...],
                            preferred_element_type=jnp.float32) + bb_ref[...])

    lengths = len_ref[...]                        # (Bp, 1) int32
    whhf = whhf_ref[...]                          # (H, 4H) bf16
    whhb = whhb_ref[...]

    def lstm_cell(gx_t, h, c, whh, mask):
        gates = gx_t + jnp.dot(h.astype(jnp.bfloat16), whh,
                               preferred_element_type=jnp.float32)  # (Bp, 4H)
        sg = jax.nn.sigmoid(gates[:, :H3])        # [i | f | o] — one EUP block
        g = jnp.tanh(gates[:, H3:])               # [g]         — one EUP block
        i_g = sg[:, 0:H]
        f_g = sg[:, H:2 * H]
        o_g = sg[:, 2 * H:H3]
        c_new = f_g * c + i_g * g
        h_new = o_g * jnp.tanh(c_new)
        # pack_padded_sequence semantics via per-row length masking.
        return jnp.where(mask, h_new, h), jnp.where(mask, c_new, c)

    def step(s, carry):
        hf, cf, hb, cb = carry
        # Forward: local step s -> global time chunk*Tc + s.
        tf = chunk * Tc + s
        rf = pl.multiple_of(s * Bp, Bp)
        hf, cf = lstm_cell(gxf_ref[pl.ds(rf, Bp), :], hf, cf, whhf,
                           lengths > tf)
        # Backward: local step Tc-1-s of the mirrored chunk -> global time
        # t_total-1 - (chunk*Tc + s), strictly decreasing across the grid.
        sb = Tc - 1 - s
        tb = t_total - 1 - (chunk * Tc + s)
        rb = pl.multiple_of(sb * Bp, Bp)
        hb, cb = lstm_cell(gxb_ref[pl.ds(rb, Bp), :], hb, cb, whhb,
                           lengths > tb)
        return hf, cf, hb, cb

    carry0 = (hf_ref[...], cf_ref[...], hb_ref[...], cb_ref[...])
    hf, cf, hb, cb = lax.fori_loop(0, Tc, step, carry0, unroll=min(Tc, 8))

    hf_ref[...] = hf
    cf_ref[...] = cf
    hb_ref[...] = hb
    cb_ref[...] = cb

    # Final hidden states after the last chunk (output block is grid-resident).
    @pl.when(chunk == n_chunks - 1)
    def _():
        out_ref[0] = hf
        out_ref[1] = hb


# ----------------------------------------------------------------------------
# Wrapper: embedding lookup + layout/parameter plumbing in plain JAX, the whole
# recurrence inside a time-chunked pipelined Pallas kernel.
# ----------------------------------------------------------------------------
def char_rnn_forward(padded_chars, char_lengths, params, *, tc=4):
    """padded_chars: (B, T) int32, char_lengths: (B,) int32 -> (2, B, H)."""
    cemb = params["cemb"]                          # (V, E)
    B, T = padded_chars.shape
    E = cemb.shape[1]
    H = E
    H4 = 4 * H

    Bp = ((B + 7) // 8) * 8                        # pad batch to f32 sublane tile
    Tc = min(tc, T)                                # time-chunk length
    # TODO(synk): for production-length sequences pick Tc so Tc*Bp >= 256 rows
    # (keeps the chunk projection MXU-efficient) while staying inside VMEM.
    n_chunks = -(-T // Tc)
    T_pad = n_chunks * Tc

    # Embedding gather in bf16 (halves HBM traffic), time-major, batch/time pad.
    # Padded rows have length 0 and padded time steps are masked by lengths.
    x = cemb.astype(jnp.bfloat16)[padded_chars]                   # (B, T, E)
    x = jnp.transpose(x, (1, 0, 2))                               # (T, B, E)
    x = jnp.pad(x, ((0, T_pad - T), (0, Bp - B), (0, 0)))         # (T_pad,Bp,E)
    x2d = x.reshape(T_pad * Bp, E)

    lengths = jnp.pad(char_lengths.astype(jnp.int32),
                      (0, Bp - B)).reshape(Bp, 1)                 # padded rows: 0

    # PyTorch gate order is [i, f, g, o]; reorder to [i, f, o, g] so the kernel
    # runs sigmoid on a contiguous 3H block and tanh on the last H.
    def reorder_gates(w):
        return jnp.concatenate([w[:2 * H], w[3 * H:], w[2 * H:3 * H]], axis=0)

    wihf = reorder_gates(params["w_ih_f"]).T.astype(jnp.bfloat16)   # (E, 4H)
    wihb = reorder_gates(params["w_ih_b"]).T.astype(jnp.bfloat16)
    whhf = reorder_gates(params["w_hh_f"]).T.astype(jnp.bfloat16)   # (H, 4H)
    whhb = reorder_gates(params["w_hh_b"]).T.astype(jnp.bfloat16)
    bf = reorder_gates(params["b_ih_f"] + params["b_hh_f"]
                       ).reshape(1, H4).astype(jnp.float32)
    bb = reorder_gates(params["b_ih_b"] + params["b_hh_b"]
                       ).reshape(1, H4).astype(jnp.float32)

    # Explicit VMEM budget (double-buffered x chunks + weights + scratch + out).
    vmem_bytes = int(
        4 * (Tc * Bp * E * 2)                # x chunks: 2 dirs x 2 buffers, bf16
        + 4 * (E * H4 + H * H4) * 2          # wih/whh: 2 dirs x 2 buffers, bf16
        + 4 * H4 * 4 + 2 * Bp * 4            # biases + lengths (padded tiles)
        + 2 * (Tc * Bp * H4) * 4             # per-chunk gx scratch (f32)
        + 4 * (Bp * H) * 4                   # persistent h/c carry scratch
        + 2 * (2 * Bp * H) * 4               # output
    )
    vmem_limit = min(max(2 * vmem_bytes, 8 << 20), 48 << 20)

    out = pl.pallas_call(
        birnn_lstm_kernel,
        out_shape=jax.ShapeDtypeStruct((2, Bp, H), jnp.float32),
        grid=(n_chunks,),
        in_specs=[
            pl.BlockSpec((Bp, 1), lambda i: (0, 0)),                    # lengths
            pl.BlockSpec((Tc * Bp, E), lambda i: (i, 0)),               # x fwd
            pl.BlockSpec((Tc * Bp, E), lambda i: (n_chunks - 1 - i, 0)),  # x bwd
            pl.BlockSpec((E, H4), lambda i: (0, 0)),                    # wih_f
            pl.BlockSpec((E, H4), lambda i: (0, 0)),                    # wih_b
            pl.BlockSpec((H, H4), lambda i: (0, 0)),                    # whh_f
            pl.BlockSpec((H, H4), lambda i: (0, 0)),                    # whh_b
            pl.BlockSpec((1, H4), lambda i: (0, 0)),                    # bias_f
            pl.BlockSpec((1, H4), lambda i: (0, 0)),                    # bias_b
        ],
        out_specs=pl.BlockSpec((2, Bp, H), lambda i: (0, 0, 0)),
        scratch_shapes=[
            pltpu.VMEM((Bp, H), jnp.float32),          # h forward  (persists)
            pltpu.VMEM((Bp, H), jnp.float32),          # c forward
            pltpu.VMEM((Bp, H), jnp.float32),          # h backward
            pltpu.VMEM((Bp, H), jnp.float32),          # c backward
            pltpu.VMEM((Tc * Bp, H4), jnp.float32),    # gx forward (per chunk)
            pltpu.VMEM((Tc * Bp, H4), jnp.float32),    # gx backward (per chunk)
        ],
        compiler_params=pltpu.CompilerParams(
            dimension_semantics=("arbitrary",),
            vmem_limit_bytes=vmem_limit),
    )(lengths, x2d, x2d, wihf, wihb, whhf, whhb, bf, bb)

    return out[:, :B, :]                              # (2, B, H)


# ----------------------------------------------------------------------------
# Pure-JAX reference (independent loop, matched bf16-matmul / f32-elementwise
# numerics, PyTorch [i, f, g, o] gate order) for the correctness check.
# ----------------------------------------------------------------------------
def char_rnn_reference(padded_chars, char_lengths, params):
    cemb = params["cemb"]
    B, T = padded_chars.shape
    E = cemb.shape[1]
    H = E
    x = cemb[padded_chars].astype(jnp.float32)      # (B, T, E)
    lengths = char_lengths.astype(jnp.int32)

    def run_dir(w_ih, w_hh, b_ih, b_hh, reverse):
        h = jnp.zeros((B, H), jnp.float32)
        c = jnp.zeros((B, H), jnp.float32)
        bias = (b_ih + b_hh)[None, :].astype(jnp.float32)
        wi = w_ih.T.astype(jnp.bfloat16)
        wh = w_hh.T.astype(jnp.bfloat16)
        time_order = range(T - 1, -1, -1) if reverse else range(T)
        for t in time_order:
            x_t = x[:, t, :].astype(jnp.bfloat16)
            gates = (jnp.dot(x_t, wi, preferred_element_type=jnp.float32)
                     + jnp.dot(h.astype(jnp.bfloat16), wh,
                               preferred_element_type=jnp.float32)
                     + bias)
            i = jax.nn.sigmoid(gates[:, 0 * H:1 * H])
            f = jax.nn.sigmoid(gates[:, 1 * H:2 * H])
            g = jnp.tanh(gates[:, 2 * H:3 * H])
            o = jax.nn.sigmoid(gates[:, 3 * H:4 * H])
            c_new = f * c + i * g
            h_new = o * jnp.tanh(c_new)
            mask = (lengths > t)[:, None]
            h = jnp.where(mask, h_new, h)
            c = jnp.where(mask, c_new, c)
        return h

    h_f = run_dir(params["w_ih_f"], params["w_hh_f"],
                  params["b_ih_f"], params["b_hh_f"], reverse=False)
    h_b = run_dir(params["w_ih_b"], params["w_hh_b"],
                  params["b_ih_b"], params["b_hh_b"], reverse=True)
    return jnp.stack([h_f, h_b], axis=0)


# ----------------------------------------------------------------------------
# Deterministic parameter init + example run.
# ----------------------------------------------------------------------------
def init_params(key, vocab_size, emb_dim):
    H = emb_dim
    k = 1.0 / jnp.sqrt(H)
    keys = jax.random.split(key, 9)
    uni = lambda kk, shape: jax.random.uniform(kk, shape, jnp.float32, -k, k)
    return {
        "cemb":   jax.random.normal(keys[0], (vocab_size, emb_dim), jnp.float32),
        "w_ih_f": uni(keys[1], (4 * H, emb_dim)),
        "w_hh_f": uni(keys[2], (4 * H, H)),
        "b_ih_f": uni(keys[3], (4 * H,)),
        "b_hh_f": uni(keys[4], (4 * H,)),
        "w_ih_b": uni(keys[5], (4 * H, emb_dim)),
        "w_hh_b": uni(keys[6], (4 * H, H)),
        "b_ih_b": uni(keys[7], (4 * H,)),
        "b_hh_b": uni(keys[8], (4 * H,)),
    }


if __name__ == "__main__":
    B, T, V, E = 4, 8, 20, 32
    key = jax.random.PRNGKey(0)
    k_param, k_chars = jax.random.split(key)

    params = init_params(k_param, V, E)
    padded_chars = jax.random.randint(k_chars, (B, T), 0, V, dtype=jnp.int32)
    char_lengths = jnp.array([8, 5, 3, 6], dtype=jnp.int32)

    final_h = jax.block_until_ready(
        char_rnn_forward(padded_chars, char_lengths, params, tc=4))
    ref_h = jax.block_until_ready(
        char_rnn_reference(padded_chars, char_lengths, params))

    assert final_h.shape == (2, B, E), final_h.shape
    assert jnp.max(jnp.abs(final_h - ref_h)) < 1e-2

    print("KERNEL_OK")
</pallas_src>

<mosaic_0001>
module attributes {stable_mosaic.version = 11 : i64} {
  func.func @birnn_lstm_kernel(%arg0: i32, %arg1: memref<8x1xi32, #tpu.memory_space<vmem>>, %arg2: memref<32x32xbf16, #tpu.memory_space<vmem>>, %arg3: memref<32x32xbf16, #tpu.memory_space<vmem>>, %arg4: memref<32x128xbf16, #tpu.memory_space<vmem>>, %arg5: memref<32x128xbf16, #tpu.memory_space<vmem>>, %arg6: memref<32x128xbf16, #tpu.memory_space<vmem>>, %arg7: memref<32x128xbf16, #tpu.memory_space<vmem>>, %arg8: memref<1x128xf32, #tpu.memory_space<vmem>>, %arg9: memref<1x128xf32, #tpu.memory_space<vmem>>, %arg10: memref<2x8x32xf32, #tpu.memory_space<vmem>>, %arg11: memref<8x32xf32, #tpu.memory_space<vmem>>, %arg12: memref<8x32xf32, #tpu.memory_space<vmem>>, %arg13: memref<8x32xf32, #tpu.memory_space<vmem>>, %arg14: memref<8x32xf32, #tpu.memory_space<vmem>>, %arg15: memref<32x128xf32, #tpu.memory_space<vmem>>, %arg16: memref<32x128xf32, #tpu.memory_space<vmem>>) attributes {dimension_semantics = [#tpu.dimension_semantics<arbitrary>], iteration_bounds = array<i64: 2>, scalar_prefetch = 0 : i64, scratch_operands = 6 : i64, tpu.core_type = #tpu.core_type<tc>, window_params = [{pipeline_mode = #tpu.pipeline_mode<synchronous>, transform_indices = @transform_0, window_bounds = array<i64: 8, 1>}, {transform_indices = @transform_1, window_bounds = array<i64: 32, 32>}, {transform_indices = @transform_2, window_bounds = array<i64: 32, 32>}, {pipeline_mode = #tpu.pipeline_mode<synchronous>, transform_indices = @transform_3, window_bounds = array<i64: 32, 128>}, {pipeline_mode = #tpu.pipeline_mode<synchronous>, transform_indices = @transform_4, window_bounds = array<i64: 32, 128>}, {pipeline_mode = #tpu.pipeline_mode<synchronous>, transform_indices = @transform_5, window_bounds = array<i64: 32, 128>}, {pipeline_mode = #tpu.pipeline_mode<synchronous>, transform_indices = @transform_6, window_bounds = array<i64: 32, 128>}, {pipeline_mode = #tpu.pipeline_mode<synchronous>, transform_indices = @transform_7, window_bounds = array<i64: 1, 128>}, {pipeline_mode = #tpu.pipeline_mode<synchronous>, transform_indices = @transform_8, window_bounds = array<i64: 1, 128>}, {pipeline_mode = #tpu.pipeline_mode<synchronous>, transform_indices = @transform_9, window_bounds = array<i64: 2, 8, 32>}]} {
    %c0_i32 = arith.constant 0 : i32
    %0 = arith.cmpi eq, %arg0, %c0_i32 : i32
    %1 = arith.extui %0 : i1 to i32
    %c0_i32_0 = arith.constant 0 : i32
    %2 = arith.cmpi ne, %1, %c0_i32_0 : i32
    scf.if %2 {
      %cst_88 = arith.constant 0.000000e+00 : f32
      %303 = vector.broadcast %cst_88 : f32 to vector<8x32xf32>
      %c0_89 = arith.constant 0 : index
      %c0_90 = arith.constant 0 : index
      %304 = vector.load %arg11[%c0_89, %c0_90] : memref<8x32xf32, #tpu.memory_space<vmem>>, vector<8x32xf32>
      tpu.vector_store %arg11[%c0_89, %c0_90], %303 {strides = array<i32>} : memref<8x32xf32, #tpu.memory_space<vmem>>, vector<8x32xf32>,
      %cst_91 = arith.constant 0.000000e+00 : f32
      %305 = vector.broadcast %cst_91 : f32 to vector<8x32xf32>
      %c0_92 = arith.constant 0 : index
      %c0_93 = arith.constant 0 : index
      %306 = vector.load %arg12[%c0_92, %c0_93] : memref<8x32xf32, #tpu.memory_space<vmem>>, vector<8x32xf32>
      tpu.vector_store %arg12[%c0_92, %c0_93], %305 {strides = array<i32>} : memref<8x32xf32, #tpu.memory_space<vmem>>, vector<8x32xf32>,
      %cst_94 = arith.constant 0.000000e+00 : f32
      %307 = vector.broadcast %cst_94 : f32 to vector<8x32xf32>
      %c0_95 = arith.constant 0 : index
      %c0_96 = arith.constant 0 : index
      %308 = vector.load %arg13[%c0_95, %c0_96] : memref<8x32xf32, #tpu.memory_space<vmem>>, vector<8x32xf32>
      tpu.vector_store %arg13[%c0_95, %c0_96], %307 {strides = array<i32>} : memref<8x32xf32, #tpu.memory_space<vmem>>, vector<8x32xf32>,
      %cst_97 = arith.constant 0.000000e+00 : f32
      %309 = vector.broadcast %cst_97 : f32 to vector<8x32xf32>
      %c0_98 = arith.constant 0 : index
      %c0_99 = arith.constant 0 : index
      %310 = vector.load %arg14[%c0_98, %c0_99] : memref<8x32xf32, #tpu.memory_space<vmem>>, vector<8x32xf32>
      tpu.vector_store %arg14[%c0_98, %c0_99], %309 {strides = array<i32>} : memref<8x32xf32, #tpu.memory_space<vmem>>, vector<8x32xf32>,
    } else {
    }
    %c0 = arith.constant 0 : index
    %c0_1 = arith.constant 0 : index
    %3 = vector.load %arg2[%c0, %c0_1] : memref<32x32xbf16, #tpu.memory_space<vmem>>, vector<32x32xbf16>
    %c0_2 = arith.constant 0 : index
    %c0_3 = arith.constant 0 : index
    %4 = vector.load %arg4[%c0_2, %c0_3] : memref<32x128xbf16, #tpu.memory_space<vmem>>, vector<32x128xbf16>
    %cst = arith.constant dense<0.000000e+00> : vector<32x128xf32>
    %5 = tpu.matmul %3, %4, %cst {dimension_numbers = #tpu.dot_dimension_numbers<[1], [0], [0], [1], [0, 0, 1, 1], [], []>} : vector<32x32xbf16>, vector<32x128xbf16>, vector<32x128xf32> -> vector<32x128xf32>
    %c0_4 = arith.constant 0 : index
    %c0_5 = arith.constant 0 : index
    %6 = vector.load %arg8[%c0_4, %c0_5] : memref<1x128xf32, #tpu.memory_space<vmem>>, vector<1x128xf32>
    %7 = vector.broadcast %6 : vector<1x128xf32> to vector<32x128xf32>
    %8 = arith.addf %5, %7 : vector<32x128xf32>
    %c0_6 = arith.constant 0 : index
    %c0_7 = arith.constant 0 : index
    %9 = vector.load %arg15[%c0_6, %c0_7] : memref<32x128xf32, #tpu.memory_space<vmem>>, vector<32x128xf32>
    tpu.vector_store %arg15[%c0_6, %c0_7], %8 {strides = array<i32>} : memref<32x128xf32, #tpu.memory_space<vmem>>, vector<32x128xf32>,
    %c0_8 = arith.constant 0 : index
    %c0_9 = arith.constant 0 : index
    %10 = vector.load %arg3[%c0_8, %c0_9] : memref<32x32xbf16, #tpu.memory_space<vmem>>, vector<32x32xbf16>
    %c0_10 = arith.constant 0 : index
    %c0_11 = arith.constant 0 : index
    %11 = vector.load %arg5[%c0_10, %c0_11] : memref<32x128xbf16, #tpu.memory_space<vmem>>, vector<32x128xbf16>
    %cst_12 = arith.constant dense<0.000000e+00> : vector<32x128xf32>
    %12 = tpu.matmul %10, %11, %cst_12 {dimension_numbers = #tpu.dot_dimension_numbers<[1], [0], [0], [1], [0, 0, 1, 1], [], []>} : vector<32x32xbf16>, vector<32x128xbf16>, vector<32x128xf32> -> vector<32x128xf32>
    %c0_13 = arith.constant 0 : index
    %c0_14 = arith.constant 0 : index
    %13 = vector.load %arg9[%c0_13, %c0_14] : memref<1x128xf32, #tpu.memory_space<vmem>>, vector<1x128xf32>
    %14 = vector.broadcast %13 : vector<1x128xf32> to vector<32x128xf32>
    %15 = arith.addf %12, %14 : vector<32x128xf32>
    %c0_15 = arith.constant 0 : index
    %c0_16 = arith.constant 0 : index
    %16 = vector.load %arg16[%c0_15, %c0_16] : memref<32x128xf32, #tpu.memory_space<vmem>>, vector<32x128xf32>
    tpu.vector_store %arg16[%c0_15, %c0_16], %15 {strides = array<i32>} : memref<32x128xf32, #tpu.memory_space<vmem>>, vector<32x128xf32>,
    %c0_17 = arith.constant 0 : index
    %c0_18 = arith.constant 0 : index
    %17 = vector.load %arg1[%c0_17, %c0_18] : memref<8x1xi32, #tpu.memory_space<vmem>>, vector<8x1xi32>
    %c0_19 = arith.constant 0 : index
    %c0_20 = arith.constant 0 : index
    %18 = vector.load %arg6[%c0_19, %c0_20] : memref<32x128xbf16, #tpu.memory_space<vmem>>, vector<32x128xbf16>
    %c0_21 = arith.constant 0 : index
    %c0_22 = arith.constant 0 : index
    %19 = vector.load %arg7[%c0_21, %c0_22] : memref<32x128xbf16, #tpu.memory_space<vmem>>, vector<32x128xbf16>
    %c0_23 = arith.constant 0 : index
    %c0_24 = arith.constant 0 : index
    %20 = vector.load %arg11[%c0_23, %c0_24] : memref<8x32xf32, #tpu.memory_space<vmem>>, vector<8x32xf32>
    %c0_25 = arith.constant 0 : index
    %c0_26 = arith.constant 0 : index
    %21 = vector.load %arg12[%c0_25, %c0_26] : memref<8x32xf32, #tpu.memory_space<vmem>>, vector<8x32xf32>
    %c0_27 = arith.constant 0 : index
    %c0_28 = arith.constant 0 : index
    %22 = vector.load %arg13[%c0_27, %c0_28] : memref<8x32xf32, #tpu.memory_space<vmem>>, vector<8x32xf32>
    %c0_29 = arith.constant 0 : index
    %c0_30 = arith.constant 0 : index
    %23 = vector.load %arg14[%c0_29, %c0_30] : memref<8x32xf32, #tpu.memory_space<vmem>>, vector<8x32xf32>
    %c0_i32_31 = arith.constant 0 : i32
    %c4_i32 = arith.constant 4 : i32
    %24 = arith.muli %arg0, %c4_i32 : i32
    %25 = arith.addi %24, %c0_i32_31 : i32
    %c8_i32 = arith.constant 8 : i32
    %26 = arith.muli %c0_i32_31, %c8_i32 : i32
    %27 = tpu.assume_multiple %26, 8 : i32
    %28 = arith.index_cast %27 : i32 to index
    %c0_32 = arith.constant 0 : index
    %29 = vector.load %arg15[%28, %c0_32] : memref<32x128xf32, #tpu.memory_space<vmem>>, vector<8x128xf32>
    %30 = vector.broadcast %25 : i32 to vector<8x1xi32>
    %31 = arith.cmpi sgt, %17, %30 : vector<8x1xi32>
    %32 = arith.truncf %20 : vector<8x32xf32> to vector<8x32xbf16>
    %cst_33 = arith.constant dense<0.000000e+00> : vector<8x128xf32>
    %33 = tpu.matmul %32, %18, %cst_33 {dimension_numbers = #tpu.dot_dimension_numbers<[1], [0], [0], [1], [0, 0, 1, 1], [], []>} : vector<8x32xbf16>, vector<32x128xbf16>, vector<8x128xf32> -> vector<8x128xf32>
    %34 = arith.addf %29, %33 : vector<8x128xf32>
    %35 = vector.extract_strided_slice %34 {offsets = [0, 0], sizes = [8, 96], strides = [1, 1]} : vector<8x128xf32> to vector<8x96xf32>
    %36 = arith.negf %35 : vector<8x96xf32>
    %37 = math.exp %36 : vector<8x96xf32>
    %cst_34 = arith.constant 1.000000e+00 : f32
    %38 = vector.broadcast %cst_34 : f32 to vector<8x96xf32>
    %39 = arith.addf %38, %37 : vector<8x96xf32>
    %40 = arith.divf %38, %39 : vector<8x96xf32>
    %41 = vector.extract_strided_slice %34 {offsets = [0, 96], sizes = [8, 32], strides = [1, 1]} : vector<8x128xf32> to vector<8x32xf32>
    %42 = math.tanh %41 : vector<8x32xf32>
    %43 = vector.extract_strided_slice %40 {offsets = [0, 0], sizes = [8, 32], strides = [1, 1]} : vector<8x96xf32> to vector<8x32xf32>
    %44 = vector.extract_strided_slice %40 {offsets = [0, 32], sizes = [8, 32], strides = [1, 1]} : vector<8x96xf32> to vector<8x32xf32>
    %45 = vector.extract_strided_slice %40 {offsets = [0, 64], sizes = [8, 32], strides = [1, 1]} : vector<8x96xf32> to vector<8x32xf32>
    %46 = arith.mulf %44, %21 : vector<8x32xf32>
    %47 = arith.mulf %43, %42 : vector<8x32xf32>
    %48 = arith.addf %46, %47 : vector<8x32xf32>
    %49 = math.tanh %48 : vector<8x32xf32>
    %50 = arith.mulf %45, %49 : vector<8x32xf32>
    %51 = vector.shape_cast %31 : vector<8x1xi1> to vector<8x1xi1>
    %52 = vector.broadcast %51 : vector<8x1xi1> to vector<8x32xi1>
    %53 = arith.select %52, %50, %20 : vector<8x32xi1>, vector<8x32xf32>
    %54 = vector.shape_cast %31 : vector<8x1xi1> to vector<8x1xi1>
    %55 = vector.broadcast %54 : vector<8x1xi1> to vector<8x32xi1>
    %56 = arith.select %55, %48, %21 : vector<8x32xi1>, vector<8x32xf32>
    %c3_i32 = arith.constant 3 : i32
    %57 = arith.subi %c3_i32, %c0_i32_31 : i32
    %c4_i32_35 = arith.constant 4 : i32
    %58 = arith.muli %arg0, %c4_i32_35 : i32
    %59 = arith.addi %58, %c0_i32_31 : i32
    %c7_i32 = arith.constant 7 : i32
    %60 = arith.subi %c7_i32, %59 : i32
    %c8_i32_36 = arith.constant 8 : i32
    %61 = arith.muli %57, %c8_i32_36 : i32
    %62 = tpu.assume_multiple %61, 8 : i32
    %63 = arith.index_cast %62 : i32 to index
    %c0_37 = arith.constant 0 : index
    %64 = vector.load %arg16[%63, %c0_37] : memref<32x128xf32, #tpu.memory_space<vmem>>, vector<8x128xf32>
    %65 = vector.broadcast %60 : i32 to vector<8x1xi32>
    %66 = arith.cmpi sgt, %17, %65 : vector<8x1xi32>
    %67 = arith.truncf %22 : vector<8x32xf32> to vector<8x32xbf16>
    %cst_38 = arith.constant dense<0.000000e+00> : vector<8x128xf32>
    %68 = tpu.matmul %67, %19, %cst_38 {dimension_numbers = #tpu.dot_dimension_numbers<[1], [0], [0], [1], [0, 0, 1, 1], [], []>} : vector<8x32xbf16>, vector<32x128xbf16>, vector<8x128xf32> -> vector<8x128xf32>
    %69 = arith.addf %64, %68 : vector<8x128xf32>
    %70 = vector.extract_strided_slice %69 {offsets = [0, 0], sizes = [8, 96], strides = [1, 1]} : vector<8x128xf32> to vector<8x96xf32>
    %71 = arith.negf %70 : vector<8x96xf32>
    %72 = math.exp %71 : vector<8x96xf32>
    %cst_39 = arith.constant 1.000000e+00 : f32
    %73 = vector.broadcast %cst_39 : f32 to vector<8x96xf32>
    %74 = arith.addf %73, %72 : vector<8x96xf32>
    %75 = arith.divf %73, %74 : vector<8x96xf32>
    %76 = vector.extract_strided_slice %69 {offsets = [0, 96], sizes = [8, 32], strides = [1, 1]} : vector<8x128xf32> to vector<8x32xf32>
    %77 = math.tanh %76 : vector<8x32xf32>
    %78 = vector.extract_strided_slice %75 {offsets = [0, 0], sizes = [8, 32], strides = [1, 1]} : vector<8x96xf32> to vector<8x32xf32>
    %79 = vector.extract_strided_slice %75 {offsets = [0, 32], sizes = [8, 32], strides = [1, 1]} : vector<8x96xf32> to vector<8x32xf32>
    %80 = vector.extract_strided_slice %75 {offsets = [0, 64], sizes = [8, 32], strides = [1, 1]} : vector<8x96xf32> to vector<8x32xf32>
    %81 = arith.mulf %79, %23 : vector<8x32xf32>
    %82 = arith.mulf %78, %77 : vector<8x32xf32>
    %83 = arith.addf %81, %82 : vector<8x32xf32>
    %84 = math.tanh %83 : vector<8x32xf32>
    %85 = arith.mulf %80, %84 : vector<8x32xf32>
    %86 = vector.shape_cast %66 : vector<8x1xi1> to vector<8x1xi1>
    %87 = vector.broadcast %86 : vector<8x1xi1> to vector<8x32xi1>
    %88 = arith.select %87, %85, %22 : vector<8x32xi1>, vector<8x32xf32>
    %89 = vector.shape_cast %66 : vector<8x1xi1> to vector<8x1xi1>
    %90 = vector.broadcast %89 : vector<8x1xi1> to vector<8x32xi1>
    %91 = arith.select %90, %83, %23 : vector<8x32xi1>, vector<8x32xf32>
    %c1_i32 = arith.constant 1 : i32
    %c4_i32_40 = arith.constant 4 : i32
    %92 = arith.muli %arg0, %c4_i32_40 : i32
    %93 = arith.addi %92, %c1_i32 : i32
    %c8_i32_41 = arith.constant 8 : i32
    %94 = arith.muli %c1_i32, %c8_i32_41 : i32
    %95 = tpu.assume_multiple %94, 8 : i32
    %96 = arith.index_cast %95 : i32 to index
    %c0_42 = arith.constant 0 : index
    %97 = vector.load %arg15[%96, %c0_42] : memref<32x128xf32, #tpu.memory_space<vmem>>, vector<8x128xf32>
    %98 = vector.broadcast %93 : i32 to vector<8x1xi32>
    %99 = arith.cmpi sgt, %17, %98 : vector<8x1xi32>
    %100 = arith.truncf %53 : vector<8x32xf32> to vector<8x32xbf16>
    %cst_43 = arith.constant dense<0.000000e+00> : vector<8x128xf32>
    %101 = tpu.matmul %100, %18, %cst_43 {dimension_numbers = #tpu.dot_dimension_numbers<[1], [0], [0], [1], [0, 0, 1, 1], [], []>} : vector<8x32xbf16>, vector<32x128xbf16>, vector<8x128xf32> -> vector<8x128xf32>
    %102 = arith.addf %97, %101 : vector<8x128xf32>
    %103 = vector.extract_strided_slice %102 {offsets = [0, 0], sizes = [8, 96], strides = [1, 1]} : vector<8x128xf32> to vector<8x96xf32>
    %104 = arith.negf %103 : vector<8x96xf32>
    %105 = math.exp %104 : vector<8x96xf32>
    %cst_44 = arith.constant 1.000000e+00 : f32
    %106 = vector.broadcast %cst_44 : f32 to vector<8x96xf32>
    %107 = arith.addf %106, %105 : vector<8x96xf32>
    %108 = arith.divf %106, %107 : vector<8x96xf32>
    %109 = vector.extract_strided_slice %102 {offsets = [0, 96], sizes = [8, 32], strides = [1, 1]} : vector<8x128xf32> to vector<8x32xf32>
    %110 = math.tanh %109 : vector<8x32xf32>
    %111 = vector.extract_strided_slice %108 {offsets = [0, 0], sizes = [8, 32], strides = [1, 1]} : vector<8x96xf32> to vector<8x32xf32>
    %112 = vector.extract_strided_slice %108 {offsets = [0, 32], sizes = [8, 32], strides = [1, 1]} : vector<8x96xf32> to vector<8x32xf32>
    %113 = vector.extract_strided_slice %108 {offsets = [0, 64], sizes = [8, 32], strides = [1, 1]} : vector<8x96xf32> to vector<8x32xf32>
    %114 = arith.mulf %112, %56 : vector<8x32xf32>
    %115 = arith.mulf %111, %110 : vector<8x32xf32>
    %116 = arith.addf %114, %115 : vector<8x32xf32>
    %117 = math.tanh %116 : vector<8x32xf32>
    %118 = arith.mulf %113, %117 : vector<8x32xf32>
    %119 = vector.shape_cast %99 : vector<8x1xi1> to vector<8x1xi1>
    %120 = vector.broadcast %119 : vector<8x1xi1> to vector<8x32xi1>
    %121 = arith.select %120, %118, %53 : vector<8x32xi1>, vector<8x32xf32>
    %122 = vector.shape_cast %99 : vector<8x1xi1> to vector<8x1xi1>
    %123 = vector.broadcast %122 : vector<8x1xi1> to vector<8x32xi1>
    %124 = arith.select %123, %116, %56 : vector<8x32xi1>, vector<8x32xf32>
    %c3_i32_45 = arith.constant 3 : i32
    %125 = arith.subi %c3_i32_45, %c1_i32 : i32
    %c4_i32_46 = arith.constant 4 : i32
    %126 = arith.muli %arg0, %c4_i32_46 : i32
    %127 = arith.addi %126, %c1_i32 : i32
    %c7_i32_47 = arith.constant 7 : i32
    %128 = arith.subi %c7_i32_47, %127 : i32
    %c8_i32_48 = arith.constant 8 : i32
    %129 = arith.muli %125, %c8_i32_48 : i32
    %130 = tpu.assume_multiple %129, 8 : i32
    %131 = arith.index_cast %130 : i32 to index
    %c0_49 = arith.constant 0 : index
    %132 = vector.load %arg16[%131, %c0_49] : memref<32x128xf32, #tpu.memory_space<vmem>>, vector<8x128xf32>
    %133 = vector.broadcast %128 : i32 to vector<8x1xi32>
    %134 = arith.cmpi sgt, %17, %133 : vector<8x1xi32>
    %135 = arith.truncf %88 : vector<8x32xf32> to vector<8x32xbf16>
    %cst_50 = arith.constant dense<0.000000e+00> : vector<8x128xf32>
    %136 = tpu.matmul %135, %19, %cst_50 {dimension_numbers = #tpu.dot_dimension_numbers<[1], [0], [0], [1], [0, 0, 1, 1], [], []>} : vector<8x32xbf16>, vector<32x128xbf16>, vector<8x128xf32> -> vector<8x128xf32>
    %137 = arith.addf %132, %136 : vector<8x128xf32>
    %138 = vector.extract_strided_slice %137 {offsets = [0, 0], sizes = [8, 96], strides = [1, 1]} : vector<8x128xf32> to vector<8x96xf32>
    %139 = arith.negf %138 : vector<8x96xf32>
    %140 = math.exp %139 : vector<8x96xf32>
    %cst_51 = arith.constant 1.000000e+00 : f32
    %141 = vector.broadcast %cst_51 : f32 to vector<8x96xf32>
    %142 = arith.addf %141, %140 : vector<8x96xf32>
    %143 = arith.divf %141, %142 : vector<8x96xf32>
    %144 = vector.extract_strided_slice %137 {offsets = [0, 96], sizes = [8, 32], strides = [1, 1]} : vector<8x128xf32> to vector<8x32xf32>
    %145 = math.tanh %144 : vector<8x32xf32>
    %146 = vector.extract_strided_slice %143 {offsets = [0, 0], sizes = [8, 32], strides = [1, 1]} : vector<8x96xf32> to vector<8x32xf32>
    %147 = vector.extract_strided_slice %143 {offsets = [0, 32], sizes = [8, 32], strides = [1, 1]} : vector<8x96xf32> to vector<8x32xf32>
    %148 = vector.extract_strided_slice %143 {offsets = [0, 64], sizes = [8, 32], strides = [1, 1]} : vector<8x96xf32> to vector<8x32xf32>
    %149 = arith.mulf %147, %91 : vector<8x32xf32>
    %150 = arith.mulf %146, %145 : vector<8x32xf32>
    %151 = arith.addf %149, %150 : vector<8x32xf32>
    %152 = math.tanh %151 : vector<8x32xf32>
    %153 = arith.mulf %148, %152 : vector<8x32xf32>
    %154 = vector.shape_cast %134 : vector<8x1xi1> to vector<8x1xi1>
    %155 = vector.broadcast %154 : vector<8x1xi1> to vector<8x32xi1>
    %156 = arith.select %155, %153, %88 : vector<8x32xi1>, vector<8x32xf32>
    %157 = vector.shape_cast %134 : vector<8x1xi1> to vector<8x1xi1>
    %158 = vector.broadcast %157 : vector<8x1xi1> to vector<8x32xi1>
    %159 = arith.select %158, %151, %91 : vector<8x32xi1>, vector<8x32xf32>
    %c2_i32 = arith.constant 2 : i32
    %c4_i32_52 = arith.constant 4 : i32
    %160 = arith.muli %arg0, %c4_i32_52 : i32
    %161 = arith.addi %160, %c2_i32 : i32
    %c8_i32_53 = arith.constant 8 : i32
    %162 = arith.muli %c2_i32, %c8_i32_53 : i32
    %163 = tpu.assume_multiple %162, 8 : i32
    %164 = arith.index_cast %163 : i32 to index
    %c0_54 = arith.constant 0 : index
    %165 = vector.load %arg15[%164, %c0_54] : memref<32x128xf32, #tpu.memory_space<vmem>>, vector<8x128xf32>
    %166 = vector.broadcast %161 : i32 to vector<8x1xi32>
    %167 = arith.cmpi sgt, %17, %166 : vector<8x1xi32>
    %168 = arith.truncf %121 : vector<8x32xf32> to vector<8x32xbf16>
    %cst_55 = arith.constant dense<0.000000e+00> : vector<8x128xf32>
    %169 = tpu.matmul %168, %18, %cst_55 {dimension_numbers = #tpu.dot_dimension_numbers<[1], [0], [0], [1], [0, 0, 1, 1], [], []>} : vector<8x32xbf16>, vector<32x128xbf16>, vector<8x128xf32> -> vector<8x128xf32>
    %170 = arith.addf %165, %169 : vector<8x128xf32>
    %171 = vector.extract_strided_slice %170 {offsets = [0, 0], sizes = [8, 96], strides = [1, 1]} : vector<8x128xf32> to vector<8x96xf32>
    %172 = arith.negf %171 : vector<8x96xf32>
    %173 = math.exp %172 : vector<8x96xf32>
    %cst_56 = arith.constant 1.000000e+00 : f32
    %174 = vector.broadcast %cst_56 : f32 to vector<8x96xf32>
    %175 = arith.addf %174, %173 : vector<8x96xf32>
    %176 = arith.divf %174, %175 : vector<8x96xf32>
    %177 = vector.extract_strided_slice %170 {offsets = [0, 96], sizes = [8, 32], strides = [1, 1]} : vector<8x128xf32> to vector<8x32xf32>
    %178 = math.tanh %177 : vector<8x32xf32>
    %179 = vector.extract_strided_slice %176 {offsets = [0, 0], sizes = [8, 32], strides = [1, 1]} : vector<8x96xf32> to vector<8x32xf32>
    %180 = vector.extract_strided_slice %176 {offsets = [0, 32], sizes = [8, 32], strides = [1, 1]} : vector<8x96xf32> to vector<8x32xf32>
    %181 = vector.extract_strided_slice %176 {offsets = [0, 64], sizes = [8, 32], strides = [1, 1]} : vector<8x96xf32> to vector<8x32xf32>
    %182 = arith.mulf %180, %124 : vector<8x32xf32>
    %183 = arith.mulf %179, %178 : vector<8x32xf32>
    %184 = arith.addf %182, %183 : vector<8x32xf32>
    %185 = math.tanh %184 : vector<8x32xf32>
    %186 = arith.mulf %181, %185 : vector<8x32xf32>
    %187 = vector.shape_cast %167 : vector<8x1xi1> to vector<8x1xi1>
    %188 = vector.broadcast %187 : vector<8x1xi1> to vector<8x32xi1>
    %189 = arith.select %188, %186, %121 : vector<8x32xi1>, vector<8x32xf32>
    %190 = vector.shape_cast %167 : vector<8x1xi1> to vector<8x1xi1>
    %191 = vector.broadcast %190 : vector<8x1xi1> to vector<8x32xi1>
    %192 = arith.select %191, %184, %124 : vector<8x32xi1>, vector<8x32xf32>
    %c3_i32_57 = arith.constant 3 : i32
    %193 = arith.subi %c3_i32_57, %c2_i32 : i32
    %c4_i32_58 = arith.constant 4 : i32
    %194 = arith.muli %arg0, %c4_i32_58 : i32
    %195 = arith.addi %194, %c2_i32 : i32
    %c7_i32_59 = arith.constant 7 : i32
    %196 = arith.subi %c7_i32_59, %195 : i32
    %c8_i32_60 = arith.constant 8 : i32
    %197 = arith.muli %193, %c8_i32_60 : i32
    %198 = tpu.assume_multiple %197, 8 : i32
    %199 = arith.index_cast %198 : i32 to index
    %c0_61 = arith.constant 0 : index
    %200 = vector.load %arg16[%199, %c0_61] : memref<32x128xf32, #tpu.memory_space<vmem>>, vector<8x128xf32>
    %201 = vector.broadcast %196 : i32 to vector<8x1xi32>
    %202 = arith.cmpi sgt, %17, %201 : vector<8x1xi32>
    %203 = arith.truncf %156 : vector<8x32xf32> to vector<8x32xbf16>
    %cst_62 = arith.constant dense<0.000000e+00> : vector<8x128xf32>
    %204 = tpu.matmul %203, %19, %cst_62 {dimension_numbers = #tpu.dot_dimension_numbers<[1], [0], [0], [1], [0, 0, 1, 1], [], []>} : vector<8x32xbf16>, vector<32x128xbf16>, vector<8x128xf32> -> vector<8x128xf32>
    %205 = arith.addf %200, %204 : vector<8x128xf32>
    %206 = vector.extract_strided_slice %205 {offsets = [0, 0], sizes = [8, 96], strides = [1, 1]} : vector<8x128xf32> to vector<8x96xf32>
    %207 = arith.negf %206 : vector<8x96xf32>
    %208 = math.exp %207 : vector<8x96xf32>
    %cst_63 = arith.constant 1.000000e+00 : f32
    %209 = vector.broadcast %cst_63 : f32 to vector<8x96xf32>
    %210 = arith.addf %209, %208 : vector<8x96xf32>
    %211 = arith.divf %209, %210 : vector<8x96xf32>
    %212 = vector.extract_strided_slice %205 {offsets = [0, 96], sizes = [8, 32], strides = [1, 1]} : vector<8x128xf32> to vector<8x32xf32>
    %213 = math.tanh %212 : vector<8x32xf32>
    %214 = vector.extract_strided_slice %211 {offsets = [0, 0], sizes = [8, 32], strides = [1, 1]} : vector<8x96xf32> to vector<8x32xf32>
    %215 = vector.extract_strided_slice %211 {offsets = [0, 32], sizes = [8, 32], strides = [1, 1]} : vector<8x96xf32> to vector<8x32xf32>
    %216 = vector.extract_strided_slice %211 {offsets = [0, 64], sizes = [8, 32], strides = [1, 1]} : vector<8x96xf32> to vector<8x32xf32>
    %217 = arith.mulf %215, %159 : vector<8x32xf32>
    %218 = arith.mulf %214, %213 : vector<8x32xf32>
    %219 = arith.addf %217, %218 : vector<8x32xf32>
    %220 = math.tanh %219 : vector<8x32xf32>
    %221 = arith.mulf %216, %220 : vector<8x32xf32>
    %222 = vector.shape_cast %202 : vector<8x1xi1> to vector<8x1xi1>
    %223 = vector.broadcast %222 : vector<8x1xi1> to vector<8x32xi1>
    %224 = arith.select %223, %221, %156 : vector<8x32xi1>, vector<8x32xf32>
    %225 = vector.shape_cast %202 : vector<8x1xi1> to vector<8x1xi1>
    %226 = vector.broadcast %225 : vector<8x1xi1> to vector<8x32xi1>
    %227 = arith.select %226, %219, %159 : vector<8x32xi1>, vector<8x32xf32>
    %c3_i32_64 = arith.constant 3 : i32
    %c4_i32_65 = arith.constant 4 : i32
    %228 = arith.muli %arg0, %c4_i32_65 : i32
    %229 = arith.addi %228, %c3_i32_64 : i32
    %c8_i32_66 = arith.constant 8 : i32
    %230 = arith.muli %c3_i32_64, %c8_i32_66 : i32
    %231 = tpu.assume_multiple %230, 8 : i32
    %232 = arith.index_cast %231 : i32 to index
    %c0_67 = arith.constant 0 : index
    %233 = vector.load %arg15[%232, %c0_67] : memref<32x128xf32, #tpu.memory_space<vmem>>, vector<8x128xf32>
    %234 = vector.broadcast %229 : i32 to vector<8x1xi32>
    %235 = arith.cmpi sgt, %17, %234 : vector<8x1xi32>
    %236 = arith.truncf %189 : vector<8x32xf32> to vector<8x32xbf16>
    %cst_68 = arith.constant dense<0.000000e+00> : vector<8x128xf32>
    %237 = tpu.matmul %236, %18, %cst_68 {dimension_numbers = #tpu.dot_dimension_numbers<[1], [0], [0], [1], [0, 0, 1, 1], [], []>} : vector<8x32xbf16>, vector<32x128xbf16>, vector<8x128xf32> -> vector<8x128xf32>
    %238 = arith.addf %233, %237 : vector<8x128xf32>
    %239 = vector.extract_strided_slice %238 {offsets = [0, 0], sizes = [8, 96], strides = [1, 1]} : vector<8x128xf32> to vector<8x96xf32>
    %240 = arith.negf %239 : vector<8x96xf32>
    %241 = math.exp %240 : vector<8x96xf32>
    %cst_69 = arith.constant 1.000000e+00 : f32
    %242 = vector.broadcast %cst_69 : f32 to vector<8x96xf32>
    %243 = arith.addf %242, %241 : vector<8x96xf32>
    %244 = arith.divf %242, %243 : vector<8x96xf32>
    %245 = vector.extract_strided_slice %238 {offsets = [0, 96], sizes = [8, 32], strides = [1, 1]} : vector<8x128xf32> to vector<8x32xf32>
    %246 = math.tanh %245 : vector<8x32xf32>
    %247 = vector.extract_strided_slice %244 {offsets = [0, 0], sizes = [8, 32], strides = [1, 1]} : vector<8x96xf32> to vector<8x32xf32>
    %248 = vector.extract_strided_slice %244 {offsets = [0, 32], sizes = [8, 32], strides = [1, 1]} : vector<8x96xf32> to vector<8x32xf32>
    %249 = vector.extract_strided_slice %244 {offsets = [0, 64], sizes = [8, 32], strides = [1, 1]} : vector<8x96xf32> to vector<8x32xf32>
    %250 = arith.mulf %248, %192 : vector<8x32xf32>
    %251 = arith.mulf %247, %246 : vector<8x32xf32>
    %252 = arith.addf %250, %251 : vector<8x32xf32>
    %253 = math.tanh %252 : vector<8x32xf32>
    %254 = arith.mulf %249, %253 : vector<8x32xf32>
    %255 = vector.shape_cast %235 : vector<8x1xi1> to vector<8x1xi1>
    %256 = vector.broadcast %255 : vector<8x1xi1> to vector<8x32xi1>
    %257 = arith.select %256, %254, %189 : vector<8x32xi1>, vector<8x32xf32>
    %258 = vector.shape_cast %235 : vector<8x1xi1> to vector<8x1xi1>
    %259 = vector.broadcast %258 : vector<8x1xi1> to vector<8x32xi1>
    %260 = arith.select %259, %252, %192 : vector<8x32xi1>, vector<8x32xf32>
    %c3_i32_70 = arith.constant 3 : i32
    %261 = arith.subi %c3_i32_70, %c3_i32_64 : i32
    %c4_i32_71 = arith.constant 4 : i32
    %262 = arith.muli %arg0, %c4_i32_71 : i32
    %263 = arith.addi %262, %c3_i32_64 : i32
    %c7_i32_72 = arith.constant 7 : i32
    %264 = arith.subi %c7_i32_72, %263 : i32
    %c8_i32_73 = arith.constant 8 : i32
    %265 = arith.muli %261, %c8_i32_73 : i32
    %266 = tpu.assume_multiple %265, 8 : i32
    %267 = arith.index_cast %266 : i32 to index
    %c0_74 = arith.constant 0 : index
    %268 = vector.load %arg16[%267, %c0_74] : memref<32x128xf32, #tpu.memory_space<vmem>>, vector<8x128xf32>
    %269 = vector.broadcast %264 : i32 to vector<8x1xi32>
    %270 = arith.cmpi sgt, %17, %269 : vector<8x1xi32>
    %271 = arith.truncf %224 : vector<8x32xf32> to vector<8x32xbf16>
    %cst_75 = arith.constant dense<0.000000e+00> : vector<8x128xf32>
    %272 = tpu.matmul %271, %19, %cst_75 {dimension_numbers = #tpu.dot_dimension_numbers<[1], [0], [0], [1], [0, 0, 1, 1], [], []>} : vector<8x32xbf16>, vector<32x128xbf16>, vector<8x128xf32> -> vector<8x128xf32>
    %273 = arith.addf %268, %272 : vector<8x128xf32>
    %274 = vector.extract_strided_slice %273 {offsets = [0, 0], sizes = [8, 96], strides = [1, 1]} : vector<8x128xf32> to vector<8x96xf32>
    %275 = arith.negf %274 : vector<8x96xf32>
    %276 = math.exp %275 : vector<8x96xf32>
    %cst_76 = arith.constant 1.000000e+00 : f32
    %277 = vector.broadcast %cst_76 : f32 to vector<8x96xf32>
    %278 = arith.addf %277, %276 : vector<8x96xf32>
    %279 = arith.divf %277, %278 : vector<8x96xf32>
    %280 = vector.extract_strided_slice %273 {offsets = [0, 96], sizes = [8, 32], strides = [1, 1]} : vector<8x128xf32> to vector<8x32xf32>
    %281 = math.tanh %280 : vector<8x32xf32>
    %282 = vector.extract_strided_slice %279 {offsets = [0, 0], sizes = [8, 32], strides = [1, 1]} : vector<8x96xf32> to vector<8x32xf32>
    %283 = vector.extract_strided_slice %279 {offsets = [0, 32], sizes = [8, 32], strides = [1, 1]} : vector<8x96xf32> to vector<8x32xf32>
    %284 = vector.extract_strided_slice %279 {offsets = [0, 64], sizes = [8, 32], strides = [1, 1]} : vector<8x96xf32> to vector<8x32xf32>
    %285 = arith.mulf %283, %227 : vector<8x32xf32>
    %286 = arith.mulf %282, %281 : vector<8x32xf32>
    %287 = arith.addf %285, %286 : vector<8x32xf32>
    %288 = math.tanh %287 : vector<8x32xf32>
    %289 = arith.mulf %284, %288 : vector<8x32xf32>
    %290 = vector.shape_cast %270 : vector<8x1xi1> to vector<8x1xi1>
    %291 = vector.broadcast %290 : vector<8x1xi1> to vector<8x32xi1>
    %292 = arith.select %291, %289, %224 : vector<8x32xi1>, vector<8x32xf32>
    %293 = vector.shape_cast %270 : vector<8x1xi1> to vector<8x1xi1>
    %294 = vector.broadcast %293 : vector<8x1xi1> to vector<8x32xi1>
    %295 = arith.select %294, %287, %227 : vector<8x32xi1>, vector<8x32xf32>
    %c4_i32_77 = arith.constant 4 : i32
    %c0_78 = arith.constant 0 : index
    %c0_79 = arith.constant 0 : index
    %296 = vector.load %arg11[%c0_78, %c0_79] : memref<8x32xf32, #tpu.memory_space<vmem>>, vector<8x32xf32>
    tpu.vector_store %arg11[%c0_78, %c0_79], %257 {strides = array<i32>} : memref<8x32xf32, #tpu.memory_space<vmem>>, vector<8x32xf32>,
    %c0_80 = arith.constant 0 : index
    %c0_81 = arith.constant 0 : index
    %297 = vector.load %arg12[%c0_80, %c0_81] : memref<8x32xf32, #tpu.memory_space<vmem>>, vector<8x32xf32>
    tpu.vector_store %arg12[%c0_80, %c0_81], %260 {strides = array<i32>} : memref<8x32xf32, #tpu.memory_space<vmem>>, vector<8x32xf32>,
    %c0_82 = arith.constant 0 : index
    %c0_83 = arith.constant 0 : index
    %298 = vector.load %arg13[%c0_82, %c0_83] : memref<8x32xf32, #tpu.memory_space<vmem>>, vector<8x32xf32>
    tpu.vector_store %arg13[%c0_82, %c0_83], %292 {strides = array<i32>} : memref<8x32xf32, #tpu.memory_space<vmem>>, vector<8x32xf32>,
    %c0_84 = arith.constant 0 : index
    %c0_85 = arith.constant 0 : index
    %299 = vector.load %arg14[%c0_84, %c0_85] : memref<8x32xf32, #tpu.memory_space<vmem>>, vector<8x32xf32>
    tpu.vector_store %arg14[%c0_84, %c0_85], %295 {strides = array<i32>} : memref<8x32xf32, #tpu.memory_space<vmem>>, vector<8x32xf32>,
    %c1_i32_86 = arith.constant 1 : i32
    %300 = arith.cmpi eq, %arg0, %c1_i32_86 : i32
    %301 = arith.extui %300 : i1 to i32
    %c0_i32_87 = arith.constant 0 : i32
    %302 = arith.cmpi ne, %301, %c0_i32_87 : i32
    scf.if %302 {
      %c0_88 = arith.constant 0 : index
      %c0_89 = arith.constant 0 : index
      %c0_90 = arith.constant 0 : index
      %303 = vector.load %arg10[%c0_88, %c0_89, %c0_90] : memref<2x8x32xf32, #tpu.memory_space<vmem>>, vector<1x8x32xf32>
      %304 = vector.shape_cast %303 : vector<1x8x32xf32> to vector<8x32xf32>
      %305 = vector.shape_cast %257 : vector<8x32xf32> to vector<1x8x32xf32>
      tpu.vector_store %arg10[%c0_88, %c0_89, %c0_90], %305 {strides = array<i32>} : memref<2x8x32xf32, #tpu.memory_space<vmem>>, vector<1x8x32xf32>,
      %c1 = arith.constant 1 : index
      %c0_91 = arith.constant 0 : index
      %c0_92 = arith.constant 0 : index
      %306 = vector.load %arg10[%c1, %c0_91, %c0_92] : memref<2x8x32xf32, #tpu.memory_space<vmem>>, vector<1x8x32xf32>
      %307 = vector.shape_cast %306 : vector<1x8x32xf32> to vector<8x32xf32>
      %308 = vector.shape_cast %292 : vector<8x32xf32> to vector<1x8x32xf32>
      tpu.vector_store %arg10[%c1, %c0_91, %c0_92], %308 {strides = array<i32>} : memref<2x8x32xf32, #tpu.memory_space<vmem>>, vector<1x8x32xf32>,
    } else {
    }
    return
  }
  func.func @transform_0(%arg0: i32) -> (i32, i32) {
    %c0_i32 = arith.constant 0 : i32
    %c0_i32_0 = arith.constant 0 : i32
    %c0_i32_1 = arith.constant 0 : i32
    return %c0_i32, %c0_i32_0 : i32, i32
  }
  func.func @transform_1(%arg0: i32) -> (i32, i32) {
    %c0_i32 = arith.constant 0 : i32
    %c0_i32_0 = arith.constant 0 : i32
    return %arg0, %c0_i32 : i32, i32
  }
  func.func @transform_2(%arg0: i32) -> (i32, i32) {
    %c1_i32 = arith.constant 1 : i32
    %0 = arith.subi %c1_i32, %arg0 : i32
    %c0_i32 = arith.constant 0 : i32
    %c0_i32_0 = arith.constant 0 : i32
    return %0, %c0_i32 : i32, i32
  }
  func.func @transform_3(%arg0: i32) -> (i32, i32) {
    %c0_i32 = arith.constant 0 : i32
    %c0_i32_0 = arith.constant 0 : i32
    %c0_i32_1 = arith.constant 0 : i32
    return %c0_i32, %c0_i32_0 : i32, i32
  }
  func.func @transform_4(%arg0: i32) -> (i32, i32) {
    %c0_i32 = arith.constant 0 : i32
    %c0_i32_0 = arith.constant 0 : i32
    %c0_i32_1 = arith.constant 0 : i32
    return %c0_i32, %c0_i32_0 : i32, i32
  }
  func.func @transform_5(%arg0: i32) -> (i32, i32) {
    %c0_i32 = arith.constant 0 : i32
    %c0_i32_0 = arith.constant 0 : i32
    %c0_i32_1 = arith.constant 0 : i32
    return %c0_i32, %c0_i32_0 : i32, i32
  }
  func.func @transform_6(%arg0: i32) -> (i32, i32) {
    %c0_i32 = arith.constant 0 : i32
    %c0_i32_0 = arith.constant 0 : i32
    %c0_i32_1 = arith.constant 0 : i32
    return %c0_i32, %c0_i32_0 : i32, i32
  }
  func.func @transform_7(%arg0: i32) -> (i32, i32) {
    %c0_i32 = arith.constant 0 : i32
    %c0_i32_0 = arith.constant 0 : i32
    %c0_i32_1 = arith.constant 0 : i32
    return %c0_i32, %c0_i32_0 : i32, i32
  }
  func.func @transform_8(%arg0: i32) -> (i32, i32) {
    %c0_i32 = arith.constant 0 : i32
    %c0_i32_0 = arith.constant 0 : i32
    %c0_i32_1 = arith.constant 0 : i32
    return %c0_i32, %c0_i32_0 : i32, i32
  }
  func.func @transform_9(%arg0: i32) -> (i32, i32, i32) {
    %c0_i32 = arith.constant 0 : i32
    %c0_i32_0 = arith.constant 0 : i32
    %c0_i32_1 = arith.constant 0 : i32
    %c0_i32_2 = arith.constant 0 : i32
    return %c0_i32, %c0_i32_0, %c0_i32_1 : i32, i32, i32
  }
}

</mosaic_0001>

<llo_original>
// kernel: tpu_custom_call.1
$region0: #{tpu_custom_call.1}
  #allocation0 [shape = 'u32[]', space=smem, size = 0x4, offset = 0x4, fixed_abs, tag = 'smem constant byte address 0x4 - core index']
  #allocation1 [shape = 'u32[144,128]{1,0:T(1,128)}', space=vmem, size = 0x12000, scoped, tag = 'internal scratch']
  #allocation2 [shape = 'f32[8,32]{1,0:T(8,128)}', space=vmem, size = 0x1000, scoped, tag = 'scratch operand']
  #allocation3 [shape = 'f32[8,32]{1,0:T(8,128)}', space=vmem, size = 0x1000, scoped, tag = 'scratch operand']
  #allocation4 [shape = 'f32[8,32]{1,0:T(8,128)}', space=vmem, size = 0x1000, scoped, tag = 'scratch operand']
  #allocation5 [shape = 'f32[8,32]{1,0:T(8,128)}', space=vmem, size = 0x1000, scoped, tag = 'scratch operand']
  #allocation6 [shape = 'f32[32,128]{1,0:T(8,128)}', space=vmem, size = 0x4000, scoped, tag = 'scratch operand']
  #allocation7 [shape = 'f32[32,128]{1,0:T(8,128)}', space=vmem, size = 0x4000, scoped, tag = 'scratch operand']
  %s0 = inlined_call_operand.vmem [shape: s32[8,1], index: 0, kind: input, shape index: {}]
  %s1 = inlined_call_operand.vmem [shape: bf16[64,32], index: 1, kind: input, shape index: {}]
  %s2 = inlined_call_operand.vmem [shape: bf16[64,32], index: 2, kind: input, shape index: {}]
  %s3 = inlined_call_operand.vmem [shape: bf16[32,128], index: 3, kind: input, shape index: {}]
  %s4 = inlined_call_operand.vmem [shape: bf16[32,128], index: 4, kind: input, shape index: {}]
  %s5 = inlined_call_operand.vmem [shape: bf16[32,128], index: 5, kind: input, shape index: {}]
  %s6 = inlined_call_operand.vmem [shape: bf16[32,128], index: 6, kind: input, shape index: {}]
  %s7 = inlined_call_operand.vmem [shape: f32[1,128], index: 7, kind: input, shape index: {}]
  %s8 = inlined_call_operand.vmem [shape: f32[1,128], index: 8, kind: input, shape index: {}]
  %s9 = inlined_call_operand.hbm [shape: f32[2,8,32], index: 9, kind: output, shape index: {}]
  %s10 = sld [smem:[#allocation0]]
  $region77: #{tpu_custom_call.1} parent=0
    _
  %s12 = ssub.s32 1, %s10
  %s13 = scalar_select 0, %s12, %s10
  $region1: #{tpu_custom_call.1} parent=0
    #allocation8 [shape = 'u8[8192]{0}', space=vmem, size = 0x2000, scoped, tag = 'output window, operand 0, single buffered']
    #allocation9 [shape = 's32[2]{0}', space=sflag, size = 0x8, scoped, tag = 'scoped memory for tpu_custom_call.1']
    %14 = vsyncpa [#allocation9], 0
    loop: start=0, step=1, limit=4
    $region2: #{tpu_custom_call.1} parent=1 // loop_pre_header
      _
    $region3: #{tpu_custom_call.1} parent=1 // loop_header
      %s16 = sphi 0, %s20
      %p17 = scmp.ge.s32.totalorder %s16, 4
      %s24 = sphi 0, %s24
      %s26 = sphi 0, %s24
      %s27 = sphi 0, %s26
      %s41 = sphi 0, %s27
      %s47 = sphi 0, %s49
      %s50 = sphi 0, %s47
      %s51 = sphi 0, %s50
      %s67 = sphi 0, %s51
      %s75 = sphi 0, %s77
      %s78 = sphi 0, %s75
      %s79 = sphi 0, %s78
      %s95 = sphi 0, %s79
      %s99 = sphi 0, %s99
      %s101 = sphi 0, %s99
      %s102 = sphi 0, %s101
      %s116 = sphi 0, %s102
      %s120 = sphi 0, %s120
      %s122 = sphi 0, %s120
      %s123 = sphi 0, %s122
      %s137 = sphi 0, %s123
      %s141 = sphi 0, %s141
      %s143 = sphi 0, %s141
      %s144 = sphi 0, %s143
      %s158 = sphi 0, %s144
      %s162 = sphi 0, %s162
      %s164 = sphi 0, %s162
      %s165 = sphi 0, %s164
      %s179 = sphi 0, %s165
      %s183 = sphi 0, %s183
      %s185 = sphi 0, %s183
      %s186 = sphi 0, %s185
      %s200 = sphi 0, %s186
      %s204 = sphi 0, %s204
      %s206 = sphi 0, %s204
      %s207 = sphi 0, %s206
      %s221 = sphi 0, %s207
      %s225 = sphi 0, %s225
      %s227 = sphi 0, %s225
      %s228 = sphi 0, %s227
      %s242 = sphi 0, %s228
    $region4: #{tpu_custom_call.1} parent=1 // loop_header_branch
      %19 = sbr.rel (%p17) target = $region8
    $region5: #{tpu_custom_call.1} parent=1 // loop_body
      %s21 = ssub.s32 %s16, 1
      %s22 = ssub.s32 %s16, 2
      %s23 = sadd.s32 %s16, 1
      %s25 = sadd.s32 %s24, 1
      %p28 = scmp.eq.s32.totalorder %s16, 1
      %p29 = scmp.ne.s32.totalorder %s24, %s26
      %p30 = scmp.eq.s32.totalorder %s16, 0
      %p31 = por %p29, %p30
      %p32 = scmp.ne.s32.totalorder %s24, %s26
      %p33 = scmp.eq.s32.totalorder %s21, 1
      %p34 = por %p32, %p33
      %p35 = scmp.ne.s32.totalorder %s26, %s27
      %p36 = scmp.eq.s32.totalorder %s21, 0
      %p37 = por %p35, %p36
      %p38 = scmp.ne.s32.totalorder %s26, %s27
      %p39 = scmp.eq.s32.totalorder %s22, 1
      %p40 = por %p38, %p39
      %p42 = scmp.ne.s32.totalorder %s27, %s41
      %p43 = scmp.eq.s32.totalorder %s22, 0
      %p44 = por %p42, %p43
      %s45 = ssub.s32 %s16, %s23
      %p46 = scmp.eq.s32.totalorder %s45, 0
      %s48 = sadd.s32 %s47, 1
      %s49 = scalar_select %p46, %s47, %s48
      %p52 = pneg %p46
      %p53 = scmp.eq.s32.totalorder %s16, 1
      %p54 = por %p52, %p53
      %p55 = scmp.ne.s32.totalorder %s47, %s50
      %p56 = scmp.eq.s32.totalorder %s16, 0
      %p57 = por %p55, %p56
      %p58 = scmp.ne.s32.totalorder %s47, %s50
      %p59 = scmp.eq.s32.totalorder %s21, 1
      %p60 = por %p58, %p59
      %p61 = scmp.ne.s32.totalorder %s50, %s51
      %p62 = scmp.eq.s32.totalorder %s21, 0
      %p63 = por %p61, %p62
      %p64 = scmp.ne.s32.totalorder %s50, %s51
      %p65 = scmp.eq.s32.totalorder %s22, 1
      %p66 = por %p64, %p65
      %p68 = scmp.ne.s32.totalorder %s51, %s67
      %p69 = scmp.eq.s32.totalorder %s22, 0
      %p70 = por %p68, %p69
      %s71 = ssub.s32 1, %s16
      %s72 = ssub.s32 1, %s23
      %s73 = ssub.s32 %s71, %s72
      %p74 = scmp.eq.s32.totalorder %s73, 0
      %s76 = sadd.s32 %s75, 1
      %s77 = scalar_select %p74, %s75, %s76
      %p80 = pneg %p74
      %p81 = scmp.eq.s32.totalorder %s16, 1
      %p82 = por %p80, %p81
      %p83 = scmp.ne.s32.totalorder %s75, %s78
      %p84 = scmp.eq.s32.totalorder %s16, 0
      %p85 = por %p83, %p84
      %p86 = scmp.ne.s32.totalorder %s75, %s78
      %p87 = scmp.eq.s32.totalorder %s21, 1
      %p88 = por %p86, %p87
      %p89 = scmp.ne.s32.totalorder %s78, %s79
      %p90 = scmp.eq.s32.totalorder %s21, 0
      %p91 = por %p89, %p90
      %p92 = scmp.ne.s32.totalorder %s78, %s79
      %p93 = scmp.eq.s32.totalorder %s22, 1
      %p94 = por %p92, %p93
      %p96 = scmp.ne.s32.totalorder %s79, %s95
      %p97 = scmp.eq.s32.totalorder %s22, 0
      %p98 = por %p96, %p97
      %s100 = sadd.s32 %s99, 1
      %p103 = scmp.eq.s32.totalorder %s16, 1
      %p104 = scmp.ne.s32.totalorder %s99, %s101
      %p105 = scmp.eq.s32.totalorder %s16, 0
      %p106 = por %p104, %p105
      %p107 = scmp.ne.s32.totalorder %s99, %s101
      %p108 = scmp.eq.s32.totalorder %s21, 1
      %p109 = por %p107, %p108
      %p110 = scmp.ne.s32.totalorder %s101, %s102
      %p111 = scmp.eq.s32.totalorder %s21, 0
      %p112 = por %p110, %p111
      %p113 = scmp.ne.s32.totalorder %s101, %s102
      %p114 = scmp.eq.s32.totalorder %s22, 1
      %p115 = por %p113, %p114
      %p117 = scmp.ne.s32.totalorder %s102, %s116
      %p118 = scmp.eq.s32.totalorder %s22, 0
      %p119 = por %p117, %p118
      %s121 = sadd.s32 %s120, 1
      %p124 = scmp.eq.s32.totalorder %s16, 1
      %p125 = scmp.ne.s32.totalorder %s120, %s122
      %p126 = scmp.eq.s32.totalorder %s16, 0
      %p127 = por %p125, %p126
      %p128 = scmp.ne.s32.totalorder %s120, %s122
      %p129 = scmp.eq.s32.totalorder %s21, 1
      %p130 = por %p128, %p129
      %p131 = scmp.ne.s32.totalorder %s122, %s123
      %p132 = scmp.eq.s32.totalorder %s21, 0
      %p133 = por %p131, %p132
      %p134 = scmp.ne.s32.totalorder %s122, %s123
      %p135 = scmp.eq.s32.totalorder %s22, 1
      %p136 = por %p134, %p135
      %p138 = scmp.ne.s32.totalorder %s123, %s137
      %p139 = scmp.eq.s32.totalorder %s22, 0
      %p140 = por %p138, %p139
      %s142 = sadd.s32 %s141, 1
      %p145 = scmp.eq.s32.totalorder %s16, 1
      %p146 = scmp.ne.s32.totalorder %s141, %s143
      %p147 = scmp.eq.s32.totalorder %s16, 0
      %p148 = por %p146, %p147
      %p149 = scmp.ne.s32.totalorder %s141, %s143
      %p150 = scmp.eq.s32.totalorder %s21, 1
      %p151 = por %p149, %p150
      %p152 = scmp.ne.s32.totalorder %s143, %s144
      %p153 = scmp.eq.s32.totalorder %s21, 0
      %p154 = por %p152, %p153
      %p155 = scmp.ne.s32.totalorder %s143, %s144
      %p156 = scmp.eq.s32.totalorder %s22, 1
      %p157 = por %p155, %p156
      %p159 = scmp.ne.s32.totalorder %s144, %s158
      %p160 = scmp.eq.s32.totalorder %s22, 0
      %p161 = por %p159, %p160
      %s163 = sadd.s32 %s162, 1
      %p166 = scmp.eq.s32.totalorder %s16, 1
      %p167 = scmp.ne.s32.totalorder %s162, %s164
      %p168 = scmp.eq.s32.totalorder %s16, 0
      %p169 = por %p167, %p168
      %p170 = scmp.ne.s32.totalorder %s162, %s164
      %p171 = scmp.eq.s32.totalorder %s21, 1
      %p172 = por %p170, %p171
      %p173 = scmp.ne.s32.totalorder %s164, %s165
      %p174 = scmp.eq.s32.totalorder %s21, 0
      %p175 = por %p173, %p174
      %p176 = scmp.ne.s32.totalorder %s164, %s165
      %p177 = scmp.eq.s32.totalorder %s22, 1
      %p178 = por %p176, %p177
      %p180 = scmp.ne.s32.totalorder %s165, %s179
      %p181 = scmp.eq.s32.totalorder %s22, 0
      %p182 = por %p180, %p181
      %s184 = sadd.s32 %s183, 1
      %p187 = scmp.eq.s32.totalorder %s16, 1
      %p188 = scmp.ne.s32.totalorder %s183, %s185
      %p189 = scmp.eq.s32.totalorder %s16, 0
      %p190 = por %p188, %p189
      %p191 = scmp.ne.s32.totalorder %s183, %s185
      %p192 = scmp.eq.s32.totalorder %s21, 1
      %p193 = por %p191, %p192
      %p194 = scmp.ne.s32.totalorder %s185, %s186
      %p195 = scmp.eq.s32.totalorder %s21, 0
      %p196 = por %p194, %p195
      %p197 = scmp.ne.s32.totalorder %s185, %s186
      %p198 = scmp.eq.s32.totalorder %s22, 1
      %p199 = por %p197, %p198
      %p201 = scmp.ne.s32.totalorder %s186, %s200
      %p202 = scmp.eq.s32.totalorder %s22, 0
      %p203 = por %p201, %p202
      %s205 = sadd.s32 %s204, 1
      %p208 = scmp.eq.s32.totalorder %s16, 1
      %p209 = scmp.ne.s32.totalorder %s204, %s206
      %p210 = scmp.eq.s32.totalorder %s16, 0
      %p211 = por %p209, %p210
      %p212 = scmp.ne.s32.totalorder %s204, %s206
      %p213 = scmp.eq.s32.totalorder %s21, 1
      %p214 = por %p212, %p213
      %p215 = scmp.ne.s32.totalorder %s206, %s207
      %p216 = scmp.eq.s32.totalorder %s21, 0
      %p217 = por %p215, %p216
      %p218 = scmp.ne.s32.totalorder %s206, %s207
      %p219 = scmp.eq.s32.totalorder %s22, 1
      %p220 = por %p218, %p219
      %p222 = scmp.ne.s32.totalorder %s207, %s221
      %p223 = scmp.eq.s32.totalorder %s22, 0
      %p224 = por %p222, %p223
      %s226 = sadd.s32 %s225, 1
      %p229 = scmp.eq.s32.totalorder %s16, 1
      %p230 = scmp.ne.s32.totalorder %s225, %s227
      %p231 = scmp.eq.s32.totalorder %s16, 0
      %p232 = por %p230, %p231
      %p233 = scmp.ne.s32.totalorder %s225, %s227
      %p234 = scmp.eq.s32.totalorder %s21, 1
      %p235 = por %p233, %p234
      %p236 = scmp.ne.s32.totalorder %s227, %s228
      %p237 = scmp.eq.s32.totalorder %s21, 0
      %p238 = por %p236, %p237
      %p239 = scmp.ne.s32.totalorder %s227, %s228
      %p240 = scmp.eq.s32.totalorder %s22, 1
      %p241 = por %p239, %p240
      %p243 = scmp.ne.s32.totalorder %s228, %s242
      %p244 = scmp.eq.s32.totalorder %s22, 0
      %p245 = por %p243, %p244
      %p246 = scmp.le.s32.totalorder 1, %s16
      %p247 = scmp.lt.s32.totalorder %s16, 3
      %p248 = pnand %p246, %p247
      %p249 = pneg %p248
      // Predicated region
      $region9: #{tpu_custom_call.1} parent=5 // pred_check
        _
      $region10: #{tpu_custom_call.1} parent=5 // pred_check_branch
        %251 = sbr.rel (%p248) target = $region12
      $region11: #{tpu_custom_call.1} parent=5 // pred_region
        %s252 = ssub.s32 %s16, 1
        // Predicated region
        $region13: #{tpu_custom_call.1} parent=11 // pred_check
          %p253 = pneg %p37
        $region14: #{tpu_custom_call.1} parent=11 // pred_check_branch
          %255 = sbr.rel (%p253) target = $region16
        $region15: #{tpu_custom_call.1} parent=11 // pred_region
          _
        $region16: #{tpu_custom_call.1} parent=11 // pred_fallthru
          _
        // Predicated region
        $region17: #{tpu_custom_call.1} parent=11 // pred_check
          %p256 = pneg %p112
        $region18: #{tpu_custom_call.1} parent=11 // pred_check_branch
          %258 = sbr.rel (%p256) target = $region20
        $region19: #{tpu_custom_call.1} parent=11 // pred_region
          _
        $region20: #{tpu_custom_call.1} parent=11 // pred_fallthru
          _
        // Predicated region
        $region21: #{tpu_custom_call.1} parent=11 // pred_check
          %p259 = pneg %p133
        $region22: #{tpu_custom_call.1} parent=11 // pred_check_branch
          %261 = sbr.rel (%p259) target = $region24
        $region23: #{tpu_custom_call.1} parent=11 // pred_region
          _
        $region24: #{tpu_custom_call.1} parent=11 // pred_fallthru
          _
        // Predicated region
        $region25: #{tpu_custom_call.1} parent=11 // pred_check
          %p262 = pneg %p154
        $region26: #{tpu_custom_call.1} parent=11 // pred_check_branch
          %264 = sbr.rel (%p262) target = $region28
        $region27: #{tpu_custom_call.1} parent=11 // pred_region
          _
        $region28: #{tpu_custom_call.1} parent=11 // pred_fallthru
          _
        // Predicated region
        $region29: #{tpu_custom_call.1} parent=11 // pred_check
          %p265 = pneg %p175
        $region30: #{tpu_custom_call.1} parent=11 // pred_check_branch
          %267 = sbr.rel (%p265) target = $region32
        $region31: #{tpu_custom_call.1} parent=11 // pred_region
          _
        $region32: #{tpu_custom_call.1} parent=11 // pred_fallthru
          _
        // Predicated region
        $region33: #{tpu_custom_call.1} parent=11 // pred_check
          %p268 = pneg %p196
        $region34: #{tpu_custom_call.1} parent=11 // pred_check_branch
          %270 = sbr.rel (%p268) target = $region36
        $region35: #{tpu_custom_call.1} parent=11 // pred_region
          _
        $region36: #{tpu_custom_call.1} parent=11 // pred_fallthru
          _
        // Predicated region
        $region37: #{tpu_custom_call.1} parent=11 // pred_check
          %p271 = pneg %p217
        $region38: #{tpu_custom_call.1} parent=11 // pred_check_branch
          %273 = sbr.rel (%p271) target = $region40
        $region39: #{tpu_custom_call.1} parent=11 // pred_region
          _
        $region40: #{tpu_custom_call.1} parent=11 // pred_fallthru
          _
      $region12: #{tpu_custom_call.1} parent=5 // pred_fallthru
        _
      %p274 = scmp.lt.s32.totalorder %s16, 2
      // Predicated region
      $region41: #{tpu_custom_call.1} parent=5 // pred_check
        %p275 = pneg %p274
      $region42: #{tpu_custom_call.1} parent=5 // pred_check_branch
        %277 = sbr.rel (%p275) target = $region44
      $region43: #{tpu_custom_call.1} parent=5 // pred_region
        // Predicated region
        $region45: #{tpu_custom_call.1} parent=43 // pred_check
          %p278 = pneg %p57
        $region46: #{tpu_custom_call.1} parent=43 // pred_check_branch
          %280 = sbr.rel (%p278) target = $region48
        $region47: #{tpu_custom_call.1} parent=43 // pred_region
          %s281 = smul.u32 4, %s16
          %p282 = scmp.lt.s32.totalorder %s281, 7
          %s283 = scalar_select %p282, %s281, 7
          %s284 = smul.addr %s283, 4
          %s285 = scalar_lea.vmem %s1, %s284
          %s286 = smul.u32 4, %s16
        $region48: #{tpu_custom_call.1} parent=43 // pred_fallthru
          _
        // Predicated region
        $region49: #{tpu_custom_call.1} parent=43 // pred_check
          %p287 = pneg %p85
        $region50: #{tpu_custom_call.1} parent=43 // pred_check_branch
          %289 = sbr.rel (%p287) target = $region52
        $region51: #{tpu_custom_call.1} parent=43 // pred_region
          %s290 = ssub.s32 1, %s16
          %s291 = smul.u32 4, %s290
          %p292 = scmp.lt.s32.totalorder %s291, 7
          %s293 = scalar_select %p292, %s291, 7
          %s294 = smul.addr %s293, 4
          %s295 = scalar_lea.vmem %s2, %s294
          %s296 = ssub.s32 1, %s16
          %s297 = smul.u32 4, %s296
        $region52: #{tpu_custom_call.1} parent=43 // pred_fallthru
          _
      $region44: #{tpu_custom_call.1} parent=5 // pred_fallthru
        _
      %p298 = scmp.le.s32.totalorder 1, %s16
      %p299 = scmp.lt.s32.totalorder %s16, 3
      %p300 = pnand %p298, %p299
      %p301 = pneg %p300
      // Predicated region
      $region53: #{tpu_custom_call.1} parent=5 // pred_check
        _
      $region54: #{tpu_custom_call.1} parent=5 // pred_check_branch
        %303 = sbr.rel (%p300) target = $region56
      $region55: #{tpu_custom_call.1} parent=5 // pred_region
        %s304 = ssub.s32 %s16, 1
        %p305 = pneg %p37
        %p306 = pneg %p34
        %s307 = smul.u32 4, %s21
        %p308 = scmp.lt.s32.totalorder %s307, 7
        %s309 = scalar_select %p308, %s307, 7
        %s310 = smul.addr %s309, 4
        %s311 = scalar_lea.vmem %s1, %s310
        %p312 = pneg %p63
        %p313 = pneg %p60
        %s314 = ssub.s32 1, %s21
        %s315 = smul.u32 4, %s314
        %p316 = scmp.lt.s32.totalorder %s315, 7
        %s317 = scalar_select %p316, %s315, 7
        %s318 = smul.addr %s317, 4
        %s319 = scalar_lea.vmem %s2, %s318
        %p320 = pneg %p91
        %p321 = pneg %p88
        %p322 = pneg %p112
        %p323 = pneg %p109
        %p324 = pneg %p133
        %p325 = pneg %p130
        %p326 = pneg %p154
        %p327 = pneg %p151
        %p328 = pneg %p175
        %p329 = pneg %p172
        %p330 = pneg %p196
        %p331 = pneg %p193
        %p332 = pneg %p217
        %p333 = pneg %p214
        %p334 = pneg %p238
        %p335 = pneg %p235
        %s336 = smul.u32 4, %s21
        %p337 = scmp.lt.s32.totalorder %s336, 7
        %s338 = scalar_select %p337, %s336, 7
        %s339 = smul.addr %s338, 4
        %s340 = scalar_lea.vmem %s1, %s339
        %s341 = smul.u32 4, %s21
        %s342 = ssub.s32 1, %s21
        %s343 = smul.u32 4, %s342
        %p344 = scmp.lt.s32.totalorder %s343, 7
        %s345 = scalar_select %p344, %s343, 7
        %s346 = smul.addr %s345, 4
        %s347 = scalar_lea.vmem %s2, %s346
        %s348 = ssub.s32 1, %s21
        %s349 = smul.u32 4, %s348
        %p351 = scmp.eq.s32.totalorder %s21, 0
        // Predicated region
        $region57: #{tpu_custom_call.1} parent=55 // pred_check
          %p352 = pneg %p351
        $region58: #{tpu_custom_call.1} parent=55 // pred_check_branch
          %354 = sbr.rel (%p352) target = $region60
        $region59: #{tpu_custom_call.1} parent=55 // pred_region
          %vm355 = vcmask 261120
          %356 = vst.msk [vmem:[#allocation2] sm:$0xff] %vm355, 0.0
          %357 = vst.msk [vmem:[#allocation3] sm:$0xff] %vm355, 0.0
          %358 = vst.msk [vmem:[#allocation4] sm:$0xff] %vm355, 0.0
          %359 = vst.msk [vmem:[#allocation5] sm:$0xff] %vm355, 0.0
        $region60: #{tpu_custom_call.1} parent=55 // pred_fallthru
          _
        %v360 = vld [vmem:[%s340] sm:$0xf]
        %v361 = vld [vmem:[%s340 + $0x4] sm:$0xf]
        %v362 = vld [vmem:[%s340 + $0x8] sm:$0xf]
        %v363 = vld [vmem:[%s340 + $0xc] sm:$0xf]
        %v364 = vld [vmem:[%s3] sm:$0xf]
        %v365 = vld [vmem:[%s3 + $0x4] sm:$0xf]
        %v366 = vld [vmem:[%s3 + $0x8] sm:$0xf]
        %v367 = vld [vmem:[%s3 + $0xc] sm:$0xf]
        %v368 = vld [vmem:[%s7] sm:$0x1]
        %v370 = vlaneseq
        %v371 = vshrl.u32 %v370, 7
        %v372 = vsub.s32 0, %v371
        %v373 = vrot.slane %v368, %v372
        %v379 = vunpack.c.l.b16 %v360
        %v380 = vunpack.c.l.b16 %v361
        %v381 = vunpack.c.l.b16 %v362
        %v382 = vunpack.c.l.b16 %v363
        %v383 = vpack.c.b16 %v380, %v379
        %v384 = vpack.c.b16 %v382, %v381
        %v389 = vunpack.c.l.b16 %v364
        %v390 = vunpack.c.l.b16 %v365
        %v391 = vunpack.c.l.b16 %v366
        %v392 = vunpack.c.l.b16 %v367
        %v393 = vpack.c.b16 %v390, %v389
        %v394 = vpack.c.b16 %v392, %v391
        %vm397 = vcmask 261120
        %v399 = vsel %vm397, %v383, 0
        %v402 = vsel %vm397, %v384, 0
        %404 = vmatprep.subr.bf16.mxu0 0
        %405 = vmatpush1.bf16.msra.mxu0 %v393
        %406 = vmatprep.subr.bf16.mxu0 0
        %407 = vmatpush1.bf16.msra.mxu0 %v394
        %408 = vmatprep.subr.bf16.mxu0 0
        %409 = vmatpush1.bf16.msra.mxu0 0
        %410 = vmatprep.subr.bf16.mxu0 0
        %411 = vmatpush1.bf16.msra.mxu0 0
        %412 = vmatprep.subr.bf16.mxu0 0
        %413 = vmatpush1.bf16.msra.mxu0 0
        %414 = vmatprep.subr.bf16.mxu0 0
        %415 = vmatpush1.bf16.msra.mxu0 0
        %416 = vmatprep.subr.bf16.mxu0 0
        %417 = vmatpush1.bf16.msra.mxu0 0
        %418 = vmatprep.subr.bf16.mxu0 0
        %419 = vmatpush1.bf16.msra.mxu0 0
        %420 = vmatprep.subr.bf16.mxu0 0
        %421 = vmatpush1.bf16.msra.mxu0 0
        %422 = vmatprep.subr.bf16.mxu0 0
        %423 = vmatpush1.bf16.msra.mxu0 0
        %424 = vmatprep.subr.bf16.mxu0 0
        %425 = vmatpush1.bf16.msra.mxu0 0
        %426 = vmatprep.subr.bf16.mxu0 0
        %427 = vmatpush1.bf16.msra.mxu0 0
        %428 = vmatprep.subr.bf16.mxu0 0
        %429 = vmatpush1.bf16.msra.mxu0 0
        %430 = vmatprep.subr.bf16.mxu0 0
        %431 = vmatpush1.bf16.msra.mxu0 0
        %432 = vmatprep.subr.bf16.mxu0 0
        %433 = vmatpush1.bf16.msra.mxu0 0
        %434 = vmatprep.subr.bf16.mxu0 0
        %435 = vmatpush1.bf16.msra.mxu0 0
        %436 = vmatprep.mubr.bf16.mxu0 0
        %437 = vmatmul.mubr.bf16.gmra.mrb[0].mxu0 %v399
        %v438 = vpop.f32.mrb[0].mxu0
        %v439 = vadd.f32 %v373, %v438
        %v440 = vpop.f32.mrb[0].mxu0
        %v441 = vpop.f32.mrb[0].mxu0
        %v442 = vadd.f32 %v373, %v441
        %v443 = vpop.f32.mrb[0].mxu0
        %444 = vmatprep.mubr.bf16.mxu0 0
        %445 = vmatmul.mubr.bf16.gmra.mrb[0].mxu0 %v402
        %v446 = vpop.f32.mrb[0].mxu0
        %v447 = vadd.f32 %v373, %v446
        %v448 = vpop.f32.mrb[0].mxu0
        %v449 = vpop.f32.mrb[0].mxu0
        %v450 = vadd.f32 %v373, %v449
        %v451 = vpop.f32.mrb[0].mxu0
        %452 = vdwg.mxu0
        %453 = vst [vmem:[#allocation6] sm:$0xff] %v439
        %454 = vst [vmem:[#allocation6 + $0x8] sm:$0xff] %v442
        %455 = vst [vmem:[#allocation6 + $0x10] sm:$0xff] %v447
        %456 = vst [vmem:[#allocation6 + $0x18] sm:$0xff] %v450
        %v457 = vld [vmem:[%s347] sm:$0xf]
        %v458 = vld [vmem:[%s347 + $0x4] sm:$0xf]
        %v459 = vld [vmem:[%s347 + $0x8] sm:$0xf]
        %v460 = vld [vmem:[%s347 + $0xc] sm:$0xf]
        %v461 = vld [vmem:[%s4] sm:$0xf]
        %v462 = vld [vmem:[%s4 + $0x4] sm:$0xf]
        %v463 = vld [vmem:[%s4 + $0x8] sm:$0xf]
        %v464 = vld [vmem:[%s4 + $0xc] sm:$0xf]
        %v465 = vld [vmem:[%s8] sm:$0x1]
        %v467 = vlaneseq
        %v468 = vshrl.u32 %v467, 7
        %v469 = vsub.s32 0, %v468
        %v470 = vrot.slane %v465, %v469
        %v476 = vunpack.c.l.b16 %v457
        %v477 = vunpack.c.l.b16 %v458
        %v478 = vunpack.c.l.b16 %v459
        %v479 = vunpack.c.l.b16 %v460
        %v480 = vpack.c.b16 %v477, %v476
        %v481 = vpack.c.b16 %v479, %v478
        %v486 = vunpack.c.l.b16 %v461
        %v487 = vunpack.c.l.b16 %v462
        %v488 = vunpack.c.l.b16 %v463
        %v489 = vunpack.c.l.b16 %v464
        %v490 = vpack.c.b16 %v487, %v486
        %v491 = vpack.c.b16 %v489, %v488
        %v495 = vsel %vm397, %v480, 0
        %v498 = vsel %vm397, %v481, 0
        %500 = vmatprep.subr.bf16.mxu0 0
        %501 = vmatpush1.bf16.msra.mxu0 %v490
        %502 = vmatprep.subr.bf16.mxu0 0
        %503 = vmatpush1.bf16.msra.mxu0 %v491
        %504 = vmatprep.subr.bf16.mxu0 0
        %505 = vmatpush1.bf16.msra.mxu0 0
        %506 = vmatprep.subr.bf16.mxu0 0
        %507 = vmatpush1.bf16.msra.mxu0 0
        %508 = vmatprep.subr.bf16.mxu0 0
        %509 = vmatpush1.bf16.msra.mxu0 0
        %510 = vmatprep.subr.bf16.mxu0 0
        %511 = vmatpush1.bf16.msra.mxu0 0
        %512 = vmatprep.subr.bf16.mxu0 0
        %513 = vmatpush1.bf16.msra.mxu0 0
        %514 = vmatprep.subr.bf16.mxu0 0
        %515 = vmatpush1.bf16.msra.mxu0 0
        %516 = vmatprep.subr.bf16.mxu0 0
        %517 = vmatpush1.bf16.msra.mxu0 0
        %518 = vmatprep.subr.bf16.mxu0 0
        %519 = vmatpush1.bf16.msra.mxu0 0
        %520 = vmatprep.subr.bf16.mxu0 0
        %521 = vmatpush1.bf16.msra.mxu0 0
        %522 = vmatprep.subr.bf16.mxu0 0
        %523 = vmatpush1.bf16.msra.mxu0 0
        %524 = vmatprep.subr.bf16.mxu0 0
        %525 = vmatpush1.bf16.msra.mxu0 0
        %526 = vmatprep.subr.bf16.mxu0 0
        %527 = vmatpush1.bf16.msra.mxu0 0
        %528 = vmatprep.subr.bf16.mxu0 0
        %529 = vmatpush1.bf16.msra.mxu0 0
        %530 = vmatprep.subr.bf16.mxu0 0
        %531 = vmatpush1.bf16.msra.mxu0 0
        %532 = vmatprep.mubr.bf16.mxu0 0
        %533 = vmatmul.mubr.bf16.gmra.mrb[0].mxu0 %v495
        %v534 = vpop.f32.mrb[0].mxu0
        %v535 = vadd.f32 %v470, %v534
        %v536 = vpop.f32.mrb[0].mxu0
        %v537 = vpop.f32.mrb[0].mxu0
        %v538 = vadd.f32 %v470, %v537
        %v539 = vpop.f32.mrb[0].mxu0
        %540 = vmatprep.mubr.bf16.mxu0 0
        %541 = vmatmul.mubr.bf16.gmra.mrb[0].mxu0 %v498
        %v542 = vpop.f32.mrb[0].mxu0
        %v543 = vadd.f32 %v470, %v542
        %v544 = vpop.f32.mrb[0].mxu0
        %v545 = vpop.f32.mrb[0].mxu0
        %v546 = vadd.f32 %v470, %v545
        %v547 = vpop.f32.mrb[0].mxu0
        %548 = vdwg.mxu0
        %549 = vst [vmem:[#allocation7] sm:$0xff] %v535
        %550 = vst [vmem:[#allocation7 + $0x8] sm:$0xff] %v538
        %551 = vst [vmem:[#allocation7 + $0x10] sm:$0xff] %v543
        %552 = vst [vmem:[#allocation7 + $0x18] sm:$0xff] %v546
        %v553 = vld [vmem:[%s0] sm:$0xff]
        %v554 = vld [vmem:[%s5] sm:$0xf]
        %v555 = vld [vmem:[%s5 + $0x4] sm:$0xf]
        %v556 = vld [vmem:[%s5 + $0x8] sm:$0xf]
        %v557 = vld [vmem:[%s5 + $0xc] sm:$0xf]
        %v558 = vld [vmem:[%s6] sm:$0xf]
        %v559 = vld [vmem:[%s6 + $0x4] sm:$0xf]
        %v560 = vld [vmem:[%s6 + $0x8] sm:$0xf]
        %v561 = vld [vmem:[%s6 + $0xc] sm:$0xf]
        %v562 = vld [vmem:[#allocation2] sm:$0xff]
        %v563 = vld [vmem:[#allocation3] sm:$0xff]
        %v564 = vld [vmem:[#allocation4] sm:$0xff]
        %v565 = vld [vmem:[#allocation5] sm:$0xff]
        %s566 = smul.u32 %s21, 4
        %v567 = vld [vmem:[#allocation6] sm:$0xff]
        %v568 = vstv %s566
        %vm569 = vcmp.gt.s32.totalorder %v553, %v568
        %v570 = vpack.c.bf16 %v562, %v562
        %v575 = vunpack.c.l.b16 %v554
        %v576 = vunpack.c.l.b16 %v555
        %v577 = vunpack.c.l.b16 %v556
        %v578 = vunpack.c.l.b16 %v557
        %v579 = vpack.c.b16 %v576, %v575
        %v580 = vpack.c.b16 %v578, %v577
        %v584 = vsel %vm397, %v570, 0
        %586 = vmatprep.subr.bf16.mxu0 0
        %587 = vmatpush1.bf16.msra.mxu0 %v579
        %588 = vmatprep.subr.bf16.mxu0 0
        %589 = vmatpush1.bf16.msra.mxu0 %v580
        %590 = vmatprep.subr.bf16.mxu0 0
        %591 = vmatpush1.bf16.msra.mxu0 0
        %592 = vmatprep.subr.bf16.mxu0 0
        %593 = vmatpush1.bf16.msra.mxu0 0
        %594 = vmatprep.subr.bf16.mxu0 0
        %595 = vmatpush1.bf16.msra.mxu0 0
        %596 = vmatprep.subr.bf16.mxu0 0
        %597 = vmatpush1.bf16.msra.mxu0 0
        %598 = vmatprep.subr.bf16.mxu0 0
        %599 = vmatpush1.bf16.msra.mxu0 0
        %600 = vmatprep.subr.bf16.mxu0 0
        %601 = vmatpush1.bf16.msra.mxu0 0
        %602 = vmatprep.subr.bf16.mxu0 0
        %603 = vmatpush1.bf16.msra.mxu0 0
        %604 = vmatprep.subr.bf16.mxu0 0
        %605 = vmatpush1.bf16.msra.mxu0 0
        %606 = vmatprep.subr.bf16.mxu0 0
        %607 = vmatpush1.bf16.msra.mxu0 0
        %608 = vmatprep.subr.bf16.mxu0 0
        %609 = vmatpush1.bf16.msra.mxu0 0
        %610 = vmatprep.subr.bf16.mxu0 0
        %611 = vmatpush1.bf16.msra.mxu0 0
        %612 = vmatprep.subr.bf16.mxu0 0
        %613 = vmatpush1.bf16.msra.mxu0 0
        %614 = vmatprep.subr.bf16.mxu0 0
        %615 = vmatpush1.bf16.msra.mxu0 0
        %616 = vmatprep.subr.bf16.mxu0 0
        %617 = vmatpush1.bf16.msra.mxu0 0
        %618 = vmatprep.mubr.bf16.mxu0 0
        %619 = vmatmul.mubr.bf16.gmra.mrb[0].mxu0 %v584
        %v620 = vpop.f32.mrb[0].mxu0
        %v621 = vadd.f32 0.0, %v620
        %v622 = vpop.f32.mrb[0].mxu0
        %v623 = vpop.f32.mrb[0].mxu0
        %v624 = vpop.f32.mrb[0].mxu0
        %625 = vdwg.mxu0
        %v626 = vadd.f32 %v567, %v621
        %v627 = vxor.u32 %v626, 2147483648
        %v628 = vmul.f32 %v627, 1.442695
        %v629 = vpow.pop %v628
        %v630 = vadd.f32 %v629, 1.0
        %v631 = vrcp.pop %v630
        %v632 = vmul.f32 1.0, %v631
        %v633 = vtanh.pop %v626
        %635 = vrot.lane.b32.xlu0 %v563, 32
        %v636 = vpop.permute.xlu0 %635
        %v638 = vmul.f32 %v632, %v636
        %640 = vrot.lane.b32.xlu0 %v633, 32
        %v641 = vpop.permute.xlu0 %640
        %v643 = vmul.f32 %v632, %v641
        %645 = vrot.lane.b32.xlu0 %v643, 32
        %v646 = vpop.permute.xlu0 %645
        %v648 = vadd.f32 %v638, %v646
        %v649 = vtanh.pop %v648
        %651 = vrot.lane.b32.xlu0 %v649, 32
        %v652 = vpop.permute.xlu0 %651
        %v654 = vmul.f32 %v632, %v652
        %v655 = vsel %vm569, 1, 0
        %656 = vset.pattern.permute.xlu0 0
        %657 = vperm.xlu0 %656, %v655
        %v658 = vpop.permute.xlu0 %657
        %vm659 = vcmp.eq.s32.totalorder %v658, 1
        %661 = vrot.lane.b32.xlu0 %v562, 64
        %v662 = vpop.permute.xlu0 %661
        %v664 = vsel %vm659, %v654, %v662
        %v665 = vsel %vm659, %v648, %v636
        %s666 = ssub.s32 7, %s566
        %s667 = scalar_lea.vmem [#allocation7], 24
        %v668 = vld [vmem:[%s667] sm:$0xff]
        %v669 = vstv %s666
        %vm670 = vcmp.gt.s32.totalorder %v553, %v669
        %v671 = vpack.c.bf16 %v564, %v564
        %v676 = vunpack.c.l.b16 %v558
        %v677 = vunpack.c.l.b16 %v559
        %v678 = vunpack.c.l.b16 %v560
        %v679 = vunpack.c.l.b16 %v561
        %v680 = vpack.c.b16 %v677, %v676
        %v681 = vpack.c.b16 %v679, %v678
        %v685 = vsel %vm397, %v671, 0
        %687 = vmatprep.subr.bf16.mxu0 0
        %688 = vmatpush1.bf16.msra.mxu0 %v680
        %689 = vmatprep.subr.bf16.mxu0 0
        %690 = vmatpush1.bf16.msra.mxu0 %v681
        %691 = vmatprep.subr.bf16.mxu0 0
        %692 = vmatpush1.bf16.msra.mxu0 0
        %693 = vmatprep.subr.bf16.mxu0 0
        %694 = vmatpush1.bf16.msra.mxu0 0
        %695 = vmatprep.subr.bf16.mxu0 0
        %696 = vmatpush1.bf16.msra.mxu0 0
        %697 = vmatprep.subr.bf16.mxu0 0
        %698 = vmatpush1.bf16.msra.mxu0 0
        %699 = vmatprep.subr.bf16.mxu0 0
        %700 = vmatpush1.bf16.msra.mxu0 0
        %701 = vmatprep.subr.bf16.mxu0 0
        %702 = vmatpush1.bf16.msra.mxu0 0
        %703 = vmatprep.subr.bf16.mxu0 0
        %704 = vmatpush1.bf16.msra.mxu0 0
        %705 = vmatprep.subr.bf16.mxu0 0
        %706 = vmatpush1.bf16.msra.mxu0 0
        %707 = vmatprep.subr.bf16.mxu0 0
        %708 = vmatpush1.bf16.msra.mxu0 0
        %709 = vmatprep.subr.bf16.mxu0 0
        %710 = vmatpush1.bf16.msra.mxu0 0
        %711 = vmatprep.subr.bf16.mxu0 0
        %712 = vmatpush1.bf16.msra.mxu0 0
        %713 = vmatprep.subr.bf16.mxu0 0
        %714 = vmatpush1.bf16.msra.mxu0 0
        %715 = vmatprep.subr.bf16.mxu0 0
        %716 = vmatpush1.bf16.msra.mxu0 0
        %717 = vmatprep.subr.bf16.mxu0 0
        %718 = vmatpush1.bf16.msra.mxu0 0
        %719 = vmatprep.mubr.bf16.mxu0 0
        %720 = vmatmul.mubr.bf16.gmra.mrb[0].mxu0 %v685
        %v721 = vpop.f32.mrb[0].mxu0
        %v722 = vadd.f32 0.0, %v721
        %v723 = vpop.f32.mrb[0].mxu0
        %v724 = vpop.f32.mrb[0].mxu0
        %v725 = vpop.f32.mrb[0].mxu0
        %726 = vdwg.mxu0
        %v727 = vadd.f32 %v668, %v722
        %v728 = vxor.u32 %v727, 2147483648
        %v729 = vmul.f32 %v728, 1.442695
        %v730 = vpow.pop %v729
        %v731 = vadd.f32 %v730, 1.0
        %v732 = vrcp.pop %v731
        %v733 = vmul.f32 1.0, %v732
        %v734 = vtanh.pop %v727
        %736 = vrot.lane.b32.xlu0 %v565, 32
        %v737 = vpop.permute.xlu0 %736
        %v739 = vmul.f32 %v733, %v737
        %741 = vrot.lane.b32.xlu0 %v734, 32
        %v742 = vpop.permute.xlu0 %741
        %v744 = vmul.f32 %v733, %v742
        %746 = vrot.lane.b32.xlu0 %v744, 32
        %v747 = vpop.permute.xlu0 %746
        %v749 = vadd.f32 %v739, %v747
        %v750 = vtanh.pop %v749
        %752 = vrot.lane.b32.xlu0 %v750, 32
        %v753 = vpop.permute.xlu0 %752
        %v755 = vmul.f32 %v733, %v753
        %v756 = vsel %vm670, 1, 0
        %757 = vset.pattern.permute.xlu0 0
        %758 = vperm.xlu0 %757, %v756
        %v759 = vpop.permute.xlu0 %758
        %vm760 = vcmp.eq.s32.totalorder %v759, 1
        %762 = vrot.lane.b32.xlu0 %v564, 64
        %v763 = vpop.permute.xlu0 %762
        %v765 = vsel %vm760, %v755, %v763
        %v766 = vsel %vm760, %v749, %v737
        %s767 = sadd.s32 %s566, 1
        %s768 = scalar_lea.vmem [#allocation6], 8
        %v769 = vld [vmem:[%s768] sm:$0xff]
        %v770 = vstv %s767
        %vm771 = vcmp.gt.s32.totalorder %v553, %v770
        %v772 = vpack.c.bf16 %v664, %v664
        %774 = vrot.lane.b32.xlu0 %v772, 64
        %v775 = vpop.permute.xlu0 %774
        %v777 = vsel %vm397, %v775, 0
        %779 = vmatprep.subr.bf16.mxu0 0
        %780 = vmatpush1.bf16.msra.mxu0 %v579
        %781 = vmatprep.subr.bf16.mxu0 0
        %782 = vmatpush1.bf16.msra.mxu0 %v580
        %783 = vmatprep.subr.bf16.mxu0 0
        %784 = vmatpush1.bf16.msra.mxu0 0
        %785 = vmatprep.subr.bf16.mxu0 0
        %786 = vmatpush1.bf16.msra.mxu0 0
        %787 = vmatprep.subr.bf16.mxu0 0
        %788 = vmatpush1.bf16.msra.mxu0 0
        %789 = vmatprep.subr.bf16.mxu0 0
        %790 = vmatpush1.bf16.msra.mxu0 0
        %791 = vmatprep.subr.bf16.mxu0 0
        %792 = vmatpush1.bf16.msra.mxu0 0
        %793 = vmatprep.subr.bf16.mxu0 0
        %794 = vmatpush1.bf16.msra.mxu0 0
        %795 = vmatprep.subr.bf16.mxu0 0
        %796 = vmatpush1.bf16.msra.mxu0 0
        %797 = vmatprep.subr.bf16.mxu0 0
        %798 = vmatpush1.bf16.msra.mxu0 0
        %799 = vmatprep.subr.bf16.mxu0 0
        %800 = vmatpush1.bf16.msra.mxu0 0
        %801 = vmatprep.subr.bf16.mxu0 0
        %802 = vmatpush1.bf16.msra.mxu0 0
        %803 = vmatprep.subr.bf16.mxu0 0
        %804 = vmatpush1.bf16.msra.mxu0 0
        %805 = vmatprep.subr.bf16.mxu0 0
        %806 = vmatpush1.bf16.msra.mxu0 0
        %807 = vmatprep.subr.bf16.mxu0 0
        %808 = vmatpush1.bf16.msra.mxu0 0
        %809 = vmatprep.subr.bf16.mxu0 0
        %810 = vmatpush1.bf16.msra.mxu0 0
        %811 = vmatprep.mubr.bf16.mxu0 0
        %812 = vmatmul.mubr.bf16.gmra.mrb[0].mxu0 %v777
        %v813 = vpop.f32.mrb[0].mxu0
        %v814 = vadd.f32 0.0, %v813
        %v815 = vpop.f32.mrb[0].mxu0
        %v816 = vpop.f32.mrb[0].mxu0
        %v817 = vpop.f32.mrb[0].mxu0
        %818 = vdwg.mxu0
        %v819 = vadd.f32 %v769, %v814
        %v820 = vxor.u32 %v819, 2147483648
        %v821 = vmul.f32 %v820, 1.442695
        %v822 = vpow.pop %v821
        %v823 = vadd.f32 %v822, 1.0
        %v824 = vrcp.pop %v823
        %v825 = vmul.f32 1.0, %v824
        %v826 = vtanh.pop %v819
        %v827 = vmul.f32 %v825, %v665
        %829 = vrot.lane.b32.xlu0 %v826, 32
        %v830 = vpop.permute.xlu0 %829
        %v832 = vmul.f32 %v825, %v830
        %834 = vrot.lane.b32.xlu0 %v832, 32
        %v835 = vpop.permute.xlu0 %834
        %v837 = vadd.f32 %v827, %v835
        %v838 = vtanh.pop %v837
        %840 = vrot.lane.b32.xlu0 %v838, 32
        %v841 = vpop.permute.xlu0 %840
        %v843 = vmul.f32 %v825, %v841
        %v844 = vsel %vm771, 1, 0
        %845 = vset.pattern.permute.xlu0 0
        %846 = vperm.xlu0 %845, %v844
        %v847 = vpop.permute.xlu0 %846
        %vm848 = vcmp.eq.s32.totalorder %v847, 1
        %v849 = vsel %vm848, %v843, %v664
        %v850 = vsel %vm848, %v837, %v665
        %s851 = ssub.s32 6, %s566
        %s852 = scalar_lea.vmem [#allocation7], 16
        %v853 = vld [vmem:[%s852] sm:$0xff]
        %v854 = vstv %s851
        %vm855 = vcmp.gt.s32.totalorder %v553, %v854
        %v856 = vpack.c.bf16 %v765, %v765
        %858 = vrot.lane.b32.xlu0 %v856, 64
        %v859 = vpop.permute.xlu0 %858
        %v861 = vsel %vm397, %v859, 0
        %863 = vmatprep.subr.bf16.mxu0 0
        %864 = vmatpush1.bf16.msra.mxu0 %v680
        %865 = vmatprep.subr.bf16.mxu0 0
        %866 = vmatpush1.bf16.msra.mxu0 %v681
        %867 = vmatprep.subr.bf16.mxu0 0
        %868 = vmatpush1.bf16.msra.mxu0 0
        %869 = vmatprep.subr.bf16.mxu0 0
        %870 = vmatpush1.bf16.msra.mxu0 0
        %871 = vmatprep.subr.bf16.mxu0 0
        %872 = vmatpush1.bf16.msra.mxu0 0
        %873 = vmatprep.subr.bf16.mxu0 0
        %874 = vmatpush1.bf16.msra.mxu0 0
        %875 = vmatprep.subr.bf16.mxu0 0
        %876 = vmatpush1.bf16.msra.mxu0 0
        %877 = vmatprep.subr.bf16.mxu0 0
        %878 = vmatpush1.bf16.msra.mxu0 0
        %879 = vmatprep.subr.bf16.mxu0 0
        %880 = vmatpush1.bf16.msra.mxu0 0
        %881 = vmatprep.subr.bf16.mxu0 0
        %882 = vmatpush1.bf16.msra.mxu0 0
        %883 = vmatprep.subr.bf16.mxu0 0
        %884 = vmatpush1.bf16.msra.mxu0 0
        %885 = vmatprep.subr.bf16.mxu0 0
        %886 = vmatpush1.bf16.msra.mxu0 0
        %887 = vmatprep.subr.bf16.mxu0 0
        %888 = vmatpush1.bf16.msra.mxu0 0
        %889 = vmatprep.subr.bf16.mxu0 0
        %890 = vmatpush1.bf16.msra.mxu0 0
        %891 = vmatprep.subr.bf16.mxu0 0
        %892 = vmatpush1.bf16.msra.mxu0 0
        %893 = vmatprep.subr.bf16.mxu0 0
        %894 = vmatpush1.bf16.msra.mxu0 0
        %895 = vmatprep.mubr.bf16.mxu0 0
        %896 = vmatmul.mubr.bf16.gmra.mrb[0].mxu0 %v861
        %v897 = vpop.f32.mrb[0].mxu0
        %v898 = vadd.f32 0.0, %v897
        %v899 = vpop.f32.mrb[0].mxu0
        %v900 = vpop.f32.mrb[0].mxu0
        %v901 = vpop.f32.mrb[0].mxu0
        %902 = vdwg.mxu0
        %v903 = vadd.f32 %v853, %v898
        %v904 = vxor.u32 %v903, 2147483648
        %v905 = vmul.f32 %v904, 1.442695
        %v906 = vpow.pop %v905
        %v907 = vadd.f32 %v906, 1.0
        %v908 = vrcp.pop %v907
        %v909 = vmul.f32 1.0, %v908
        %v910 = vtanh.pop %v903
        %v911 = vmul.f32 %v909, %v766
        %913 = vrot.lane.b32.xlu0 %v910, 32
        %v914 = vpop.permute.xlu0 %913
        %v916 = vmul.f32 %v909, %v914
        %918 = vrot.lane.b32.xlu0 %v916, 32
        %v919 = vpop.permute.xlu0 %918
        %v921 = vadd.f32 %v911, %v919
        %v922 = vtanh.pop %v921
        %924 = vrot.lane.b32.xlu0 %v922, 32
        %v925 = vpop.permute.xlu0 %924
        %v927 = vmul.f32 %v909, %v925
        %v928 = vsel %vm855, 1, 0
        %929 = vset.pattern.permute.xlu0 0
        %930 = vperm.xlu0 %929, %v928
        %v931 = vpop.permute.xlu0 %930
        %vm932 = vcmp.eq.s32.totalorder %v931, 1
        %v933 = vsel %vm932, %v927, %v765
        %v934 = vsel %vm932, %v921, %v766
        %s935 = sadd.s32 %s566, 2
        %s936 = scalar_lea.vmem [#allocation6], 16
        %v937 = vld [vmem:[%s936] sm:$0xff]
        %v938 = vstv %s935
        %vm939 = vcmp.gt.s32.totalorder %v553, %v938
        %v940 = vpack.c.bf16 %v849, %v849
        %942 = vrot.lane.b32.xlu0 %v940, 64
        %v943 = vpop.permute.xlu0 %942
        %v945 = vsel %vm397, %v943, 0
        %947 = vmatprep.subr.bf16.mxu0 0
        %948 = vmatpush1.bf16.msra.mxu0 %v579
        %949 = vmatprep.subr.bf16.mxu0 0
        %950 = vmatpush1.bf16.msra.mxu0 %v580
        %951 = vmatprep.subr.bf16.mxu0 0
        %952 = vmatpush1.bf16.msra.mxu0 0
        %953 = vmatprep.subr.bf16.mxu0 0
        %954 = vmatpush1.bf16.msra.mxu0 0
        %955 = vmatprep.subr.bf16.mxu0 0
        %956 = vmatpush1.bf16.msra.mxu0 0
        %957 = vmatprep.subr.bf16.mxu0 0
        %958 = vmatpush1.bf16.msra.mxu0 0
        %959 = vmatprep.subr.bf16.mxu0 0
        %960 = vmatpush1.bf16.msra.mxu0 0
        %961 = vmatprep.subr.bf16.mxu0 0
        %962 = vmatpush1.bf16.msra.mxu0 0
        %963 = vmatprep.subr.bf16.mxu0 0
        %964 = vmatpush1.bf16.msra.mxu0 0
        %965 = vmatprep.subr.bf16.mxu0 0
        %966 = vmatpush1.bf16.msra.mxu0 0
        %967 = vmatprep.subr.bf16.mxu0 0
        %968 = vmatpush1.bf16.msra.mxu0 0
        %969 = vmatprep.subr.bf16.mxu0 0
        %970 = vmatpush1.bf16.msra.mxu0 0
        %971 = vmatprep.subr.bf16.mxu0 0
        %972 = vmatpush1.bf16.msra.mxu0 0
        %973 = vmatprep.subr.bf16.mxu0 0
        %974 = vmatpush1.bf16.msra.mxu0 0
        %975 = vmatprep.subr.bf16.mxu0 0
        %976 = vmatpush1.bf16.msra.mxu0 0
        %977 = vmatprep.subr.bf16.mxu0 0
        %978 = vmatpush1.bf16.msra.mxu0 0
        %979 = vmatprep.mubr.bf16.mxu0 0
        %980 = vmatmul.mubr.bf16.gmra.mrb[0].mxu0 %v945
        %v981 = vpop.f32.mrb[0].mxu0
        %v982 = vadd.f32 0.0, %v981
        %v983 = vpop.f32.mrb[0].mxu0
        %v984 = vpop.f32.mrb[0].mxu0
        %v985 = vpop.f32.mrb[0].mxu0
        %986 = vdwg.mxu0
        %v987 = vadd.f32 %v937, %v982
        %v988 = vxor.u32 %v987, 2147483648
        %v989 = vmul.f32 %v988, 1.442695
        %v990 = vpow.pop %v989
        %v991 = vadd.f32 %v990, 1.0
        %v992 = vrcp.pop %v991
        %v993 = vmul.f32 1.0, %v992
        %v994 = vtanh.pop %v987
        %v995 = vmul.f32 %v993, %v850
        %997 = vrot.lane.b32.xlu0 %v994, 32
        %v998 = vpop.permute.xlu0 %997
        %v1000 = vmul.f32 %v993, %v998
        %1002 = vrot.lane.b32.xlu0 %v1000, 32
        %v1003 = vpop.permute.xlu0 %1002
        %v1005 = vadd.f32 %v995, %v1003
        %v1006 = vtanh.pop %v1005
        %1008 = vrot.lane.b32.xlu0 %v1006, 32
        %v1009 = vpop.permute.xlu0 %1008
        %v1011 = vmul.f32 %v993, %v1009
        %v1012 = vsel %vm939, 1, 0
        %1013 = vset.pattern.permute.xlu0 0
        %1014 = vperm.xlu0 %1013, %v1012
        %v1015 = vpop.permute.xlu0 %1014
        %vm1016 = vcmp.eq.s32.totalorder %v1015, 1
        %v1017 = vsel %vm1016, %v1011, %v849
        %v1018 = vsel %vm1016, %v1005, %v850
        %s1019 = ssub.s32 5, %s566
        %s1020 = scalar_lea.vmem [#allocation7], 8
        %v1021 = vld [vmem:[%s1020] sm:$0xff]
        %v1022 = vstv %s1019
        %vm1023 = vcmp.gt.s32.totalorder %v553, %v1022
        %v1024 = vpack.c.bf16 %v933, %v933
        %1026 = vrot.lane.b32.xlu0 %v1024, 64
        %v1027 = vpop.permute.xlu0 %1026
        %v1029 = vsel %vm397, %v1027, 0
        %1031 = vmatprep.subr.bf16.mxu0 0
        %1032 = vmatpush1.bf16.msra.mxu0 %v680
        %1033 = vmatprep.subr.bf16.mxu0 0
        %1034 = vmatpush1.bf16.msra.mxu0 %v681
        %1035 = vmatprep.subr.bf16.mxu0 0
        %1036 = vmatpush1.bf16.msra.mxu0 0
        %1037 = vmatprep.subr.bf16.mxu0 0
        %1038 = vmatpush1.bf16.msra.mxu0 0
        %1039 = vmatprep.subr.bf16.mxu0 0
        %1040 = vmatpush1.bf16.msra.mxu0 0
        %1041 = vmatprep.subr.bf16.mxu0 0
        %1042 = vmatpush1.bf16.msra.mxu0 0
        %1043 = vmatprep.subr.bf16.mxu0 0
        %1044 = vmatpush1.bf16.msra.mxu0 0
        %1045 = vmatprep.subr.bf16.mxu0 0
        %1046 = vmatpush1.bf16.msra.mxu0 0
        %1047 = vmatprep.subr.bf16.mxu0 0
        %1048 = vmatpush1.bf16.msra.mxu0 0
        %1049 = vmatprep.subr.bf16.mxu0 0
        %1050 = vmatpush1.bf16.msra.mxu0 0
        %1051 = vmatprep.subr.bf16.mxu0 0
        %1052 = vmatpush1.bf16.msra.mxu0 0
        %1053 = vmatprep.subr.bf16.mxu0 0
        %1054 = vmatpush1.bf16.msra.mxu0 0
        %1055 = vmatprep.subr.bf16.mxu0 0
        %1056 = vmatpush1.bf16.msra.mxu0 0
        %1057 = vmatprep.subr.bf16.mxu0 0
        %1058 = vmatpush1.bf16.msra.mxu0 0
        %1059 = vmatprep.subr.bf16.mxu0 0
        %1060 = vmatpush1.bf16.msra.mxu0 0
        %1061 = vmatprep.subr.bf16.mxu0 0
        %1062 = vmatpush1.bf16.msra.mxu0 0
        %1063 = vmatprep.mubr.bf16.mxu0 0
        %1064 = vmatmul.mubr.bf16.gmra.mrb[0].mxu0 %v1029
        %v1065 = vpop.f32.mrb[0].mxu0
        %v1066 = vadd.f32 0.0, %v1065
        %v1067 = vpop.f32.mrb[0].mxu0
        %v1068 = vpop.f32.mrb[0].mxu0
        %v1069 = vpop.f32.mrb[0].mxu0
        %1070 = vdwg.mxu0
        %v1071 = vadd.f32 %v1021, %v1066
        %v1072 = vxor.u32 %v1071, 2147483648
        %v1073 = vmul.f32 %v1072, 1.442695
        %v1074 = vpow.pop %v1073
        %v1075 = vadd.f32 %v1074, 1.0
        %v1076 = vrcp.pop %v1075
        %v1077 = vmul.f32 1.0, %v1076
        %v1078 = vtanh.pop %v1071
        %v1079 = vmul.f32 %v1077, %v934
        %1081 = vrot.lane.b32.xlu0 %v1078, 32
        %v1082 = vpop.permute.xlu0 %1081
        %v1084 = vmul.f32 %v1077, %v1082
        %1086 = vrot.lane.b32.xlu0 %v1084, 32
        %v1087 = vpop.permute.xlu0 %1086
        %v1089 = vadd.f32 %v1079, %v1087
        %v1090 = vtanh.pop %v1089
        %1092 = vrot.lane.b32.xlu0 %v1090, 32
        %v1093 = vpop.permute.xlu0 %1092
        %v1095 = vmul.f32 %v1077, %v1093
        %v1096 = vsel %vm1023, 1, 0
        %1097 = vset.pattern.permute.xlu0 0
        %1098 = vperm.xlu0 %1097, %v1096
        %v1099 = vpop.permute.xlu0 %1098
        %vm1100 = vcmp.eq.s32.totalorder %v1099, 1
        %v1101 = vsel %vm1100, %v1095, %v933
        %v1102 = vsel %vm1100, %v1089, %v934
        %s1103 = sadd.s32 %s566, 3
        %s1104 = scalar_lea.vmem [#allocation6], 24
        %v1105 = vld [vmem:[%s1104] sm:$0xff]
        %v1106 = vstv %s1103
        %vm1107 = vcmp.gt.s32.totalorder %v553, %v1106
        %v1108 = vpack.c.bf16 %v1017, %v1017
        %1110 = vrot.lane.b32.xlu0 %v1108, 64
        %v1111 = vpop.permute.xlu0 %1110
        %v1113 = vsel %vm397, %v1111, 0
        %1115 = vmatprep.subr.bf16.mxu0 0
        %1116 = vmatpush1.bf16.msra.mxu0 %v579
        %1117 = vmatprep.subr.bf16.mxu0 0
        %1118 = vmatpush1.bf16.msra.mxu0 %v580
        %1119 = vmatprep.subr.bf16.mxu0 0
        %1120 = vmatpush1.bf16.msra.mxu0 0
        %1121 = vmatprep.subr.bf16.mxu0 0
        %1122 = vmatpush1.bf16.msra.mxu0 0
        %1123 = vmatprep.subr.bf16.mxu0 0
        %1124 = vmatpush1.bf16.msra.mxu0 0
        %1125 = vmatprep.subr.bf16.mxu0 0
        %1126 = vmatpush1.bf16.msra.mxu0 0
        %1127 = vmatprep.subr.bf16.mxu0 0
        %1128 = vmatpush1.bf16.msra.mxu0 0
        %1129 = vmatprep.subr.bf16.mxu0 0
        %1130 = vmatpush1.bf16.msra.mxu0 0
        %1131 = vmatprep.subr.bf16.mxu0 0
        %1132 = vmatpush1.bf16.msra.mxu0 0
        %1133 = vmatprep.subr.bf16.mxu0 0
        %1134 = vmatpush1.bf16.msra.mxu0 0
        %1135 = vmatprep.subr.bf16.mxu0 0
        %1136 = vmatpush1.bf16.msra.mxu0 0
        %1137 = vmatprep.subr.bf16.mxu0 0
        %1138 = vmatpush1.bf16.msra.mxu0 0
        %1139 = vmatprep.subr.bf16.mxu0 0
        %1140 = vmatpush1.bf16.msra.mxu0 0
        %1141 = vmatprep.subr.bf16.mxu0 0
        %1142 = vmatpush1.bf16.msra.mxu0 0
        %1143 = vmatprep.subr.bf16.mxu0 0
        %1144 = vmatpush1.bf16.msra.mxu0 0
        %1145 = vmatprep.subr.bf16.mxu0 0
        %1146 = vmatpush1.bf16.msra.mxu0 0
        %1147 = vmatprep.mubr.bf16.mxu0 0
        %1148 = vmatmul.mubr.bf16.gmra.mrb[0].mxu0 %v1113
        %v1149 = vpop.f32.mrb[0].mxu0
        %v1150 = vadd.f32 0.0, %v1149
        %v1151 = vpop.f32.mrb[0].mxu0
        %v1152 = vpop.f32.mrb[0].mxu0
        %v1153 = vpop.f32.mrb[0].mxu0
        %1154 = vdwg.mxu0
        %v1155 = vadd.f32 %v1105, %v1150
        %v1156 = vxor.u32 %v1155, 2147483648
        %v1157 = vmul.f32 %v1156, 1.442695
        %v1158 = vpow.pop %v1157
        %v1159 = vadd.f32 %v1158, 1.0
        %v1160 = vrcp.pop %v1159
        %v1161 = vmul.f32 1.0, %v1160
        %v1162 = vtanh.pop %v1155
        %v1163 = vmul.f32 %v1161, %v1018
        %1165 = vrot.lane.b32.xlu0 %v1162, 32
        %v1166 = vpop.permute.xlu0 %1165
        %v1168 = vmul.f32 %v1161, %v1166
        %1170 = vrot.lane.b32.xlu0 %v1168, 32
        %v1171 = vpop.permute.xlu0 %1170
        %v1173 = vadd.f32 %v1163, %v1171
        %v1174 = vtanh.pop %v1173
        %1176 = vrot.lane.b32.xlu0 %v1174, 32
        %v1177 = vpop.permute.xlu0 %1176
        %v1179 = vmul.f32 %v1161, %v1177
        %v1180 = vsel %vm1107, 1, 0
        %1181 = vset.pattern.permute.xlu0 0
        %1182 = vperm.xlu0 %1181, %v1180
        %v1183 = vpop.permute.xlu0 %1182
        %vm1184 = vcmp.eq.s32.totalorder %v1183, 1
        %v1185 = vsel %vm1184, %v1179, %v1017
        %v1186 = vsel %vm1184, %v1173, %v1018
        %s1187 = ssub.s32 4, %s566
        %v1188 = vld [vmem:[#allocation7] sm:$0xff]
        %v1189 = vstv %s1187
        %vm1190 = vcmp.gt.s32.totalorder %v553, %v1189
        %v1191 = vpack.c.bf16 %v1101, %v1101
        %1193 = vrot.lane.b32.xlu0 %v1191, 64
        %v1194 = vpop.permute.xlu0 %1193
        %v1196 = vsel %vm397, %v1194, 0
        %1198 = vmatprep.subr.bf16.mxu0 0
        %1199 = vmatpush1.bf16.msra.mxu0 %v680
        %1200 = vmatprep.subr.bf16.mxu0 0
        %1201 = vmatpush1.bf16.msra.mxu0 %v681
        %1202 = vmatprep.subr.bf16.mxu0 0
        %1203 = vmatpush1.bf16.msra.mxu0 0
        %1204 = vmatprep.subr.bf16.mxu0 0
        %1205 = vmatpush1.bf16.msra.mxu0 0
        %1206 = vmatprep.subr.bf16.mxu0 0
        %1207 = vmatpush1.bf16.msra.mxu0 0
        %1208 = vmatprep.subr.bf16.mxu0 0
        %1209 = vmatpush1.bf16.msra.mxu0 0
        %1210 = vmatprep.subr.bf16.mxu0 0
        %1211 = vmatpush1.bf16.msra.mxu0 0
        %1212 = vmatprep.subr.bf16.mxu0 0
        %1213 = vmatpush1.bf16.msra.mxu0 0
        %1214 = vmatprep.subr.bf16.mxu0 0
        %1215 = vmatpush1.bf16.msra.mxu0 0
        %1216 = vmatprep.subr.bf16.mxu0 0
        %1217 = vmatpush1.bf16.msra.mxu0 0
        %1218 = vmatprep.subr.bf16.mxu0 0
        %1219 = vmatpush1.bf16.msra.mxu0 0
        %1220 = vmatprep.subr.bf16.mxu0 0
        %1221 = vmatpush1.bf16.msra.mxu0 0
        %1222 = vmatprep.subr.bf16.mxu0 0
        %1223 = vmatpush1.bf16.msra.mxu0 0
        %1224 = vmatprep.subr.bf16.mxu0 0
        %1225 = vmatpush1.bf16.msra.mxu0 0
        %1226 = vmatprep.subr.bf16.mxu0 0
        %1227 = vmatpush1.bf16.msra.mxu0 0
        %1228 = vmatprep.subr.bf16.mxu0 0
        %1229 = vmatpush1.bf16.msra.mxu0 0
        %1230 = vmatprep.mubr.bf16.mxu0 0
        %1231 = vmatmul.mubr.bf16.gmra.mrb[0].mxu0 %v1196
        %v1232 = vpop.f32.mrb[0].mxu0
        %v1233 = vadd.f32 0.0, %v1232
        %v1234 = vpop.f32.mrb[0].mxu0
        %v1235 = vpop.f32.mrb[0].mxu0
        %v1236 = vpop.f32.mrb[0].mxu0
        %1237 = vdwg.mxu0
        %v1238 = vadd.f32 %v1188, %v1233
        %v1239 = vxor.u32 %v1238, 2147483648
        %v1240 = vmul.f32 %v1239, 1.442695
        %v1241 = vpow.pop %v1240
        %v1242 = vadd.f32 %v1241, 1.0
        %v1243 = vrcp.pop %v1242
        %v1244 = vmul.f32 1.0, %v1243
        %v1245 = vtanh.pop %v1238
        %v1246 = vmul.f32 %v1244, %v1102
        %1248 = vrot.lane.b32.xlu0 %v1245, 32
        %v1249 = vpop.permute.xlu0 %1248
        %v1251 = vmul.f32 %v1244, %v1249
        %1253 = vrot.lane.b32.xlu0 %v1251, 32
        %v1254 = vpop.permute.xlu0 %1253
        %v1256 = vadd.f32 %v1246, %v1254
        %v1257 = vtanh.pop %v1256
        %1259 = vrot.lane.b32.xlu0 %v1257, 32
        %v1260 = vpop.permute.xlu0 %1259
        %v1262 = vmul.f32 %v1244, %v1260
        %v1263 = vsel %vm1190, 1, 0
        %1264 = vset.pattern.permute.xlu0 0
        %1265 = vperm.xlu0 %1264, %v1263
        %v1266 = vpop.permute.xlu0 %1265
        %vm1267 = vcmp.eq.s32.totalorder %v1266, 1
        %v1268 = vsel %vm1267, %v1262, %v1101
        %v1269 = vsel %vm1267, %v1256, %v1102
        %1271 = vrot.lane.b32.xlu0 %v1185, 64
        %v1272 = vpop.permute.xlu0 %1271
        %1274 = vst.msk [vmem:[#allocation2] sm:$0xff] %vm397, %v1272
        %1276 = vrot.lane.b32.xlu0 %v1186, 96
        %v1277 = vpop.permute.xlu0 %1276
        %1279 = vst.msk [vmem:[#allocation3] sm:$0xff] %vm397, %v1277
        %1281 = vrot.lane.b32.xlu0 %v1268, 64
        %v1282 = vpop.permute.xlu0 %1281
        %1284 = vst.msk [vmem:[#allocation4] sm:$0xff] %vm397, %v1282
        %1286 = vrot.lane.b32.xlu0 %v1269, 96
        %v1287 = vpop.permute.xlu0 %1286
        %1289 = vst.msk [vmem:[#allocation5] sm:$0xff] %vm397, %v1287
        %p1290 = scmp.eq.s32.totalorder %s21, 1
        // Predicated region
        $region61: #{tpu_custom_call.1} parent=55 // pred_check
          %p1291 = pneg %p1290
        $region62: #{tpu_custom_call.1} parent=55 // pred_check_branch
          %1293 = sbr.rel (%p1291) target = $region64
        $region63: #{tpu_custom_call.1} parent=55 // pred_region
          %1294 = vst.msk [vmem:[#allocation8] sm:$0xff] %vm397, %v1272
          %s1295 = scalar_lea.vmem [#allocation8], 8
          %1296 = vst.msk [vmem:[%s1295] sm:$0xff] %vm397, %v1282
        $region64: #{tpu_custom_call.1} parent=55 // pred_fallthru
          _
        // Predicated region
        $region65: #{tpu_custom_call.1} parent=55 // pred_check
          %p1297 = pneg %p235
        $region66: #{tpu_custom_call.1} parent=55 // pred_check_branch
          %1299 = sbr.rel (%p1297) target = $region68
        $region67: #{tpu_custom_call.1} parent=55 // pred_region
          %s1301 = ssub.s32 256, 256
          %1302 = vsyncadd [#allocation9], %s1301
          %s1303 = sshll.u32 [#allocation8], 4
          %s1304 = int_to_ptr.vmem [resolvable:$true] %s1303
          %1309 = dma.vmem_to_hbm [thread:$0]  %s1304, 256, %s9, [#allocation9], 128, 128, 8
        $region68: #{tpu_custom_call.1} parent=55 // pred_fallthru
          _
        // Predicated region
        $region69: #{tpu_custom_call.1} parent=55 // pred_check
          %p1310 = pneg %p235
        $region70: #{tpu_custom_call.1} parent=55 // pred_check_branch
          %1312 = sbr.rel (%p1310) target = $region72
        $region71: #{tpu_custom_call.1} parent=55 // pred_region
          %1313 = dma.done [#allocation9], 256
        $region72: #{tpu_custom_call.1} parent=55 // pred_fallthru
          _
      $region56: #{tpu_custom_call.1} parent=5 // pred_fallthru
        _
      %p1314 = scmp.le.s32.totalorder 2, %s16
      // Predicated region
      $region73: #{tpu_custom_call.1} parent=5 // pred_check
        %p1315 = pneg %p1314
      $region74: #{tpu_custom_call.1} parent=5 // pred_check_branch
        %1317 = sbr.rel (%p1315) target = $region76
      $region75: #{tpu_custom_call.1} parent=5 // pred_region
        %s1318 = ssub.s32 %s16, 2
      $region76: #{tpu_custom_call.1} parent=5 // pred_fallthru
        _
    $region6: #{tpu_custom_call.1} parent=1 // loop_footer
      %s20 = sadd.s32 1, %s16
    $region7: #{tpu_custom_call.1} parent=1 // loop_footer_branch
      %15 = sbr.rel target = $region3
    $region8: #{tpu_custom_call.1} parent=1 // loop_exit
      _
    %1319 = vsyncpa [#allocation9], 1
    %s1320 = scalar_lea.sflag [#allocation9], 1
    %1321 = vsyncpa %s1320, 1

</llo_original>
